<compile_context>
chip_gen: v5e
topology: v5e:2x2
jax: 0.10.0
libtpu: 0.0.40
codegen_flags: <defaults>
</compile_context>

<pallas_src>
import functools

import jax
import jax.numpy as jnp
import numpy as np
from jax.experimental import pallas as pl
from jax.experimental.pallas import tpu as pltpu

# ---------------------------------------------------------------------------
# Problem sizes (small, consistent with the module's constructor)
# ---------------------------------------------------------------------------
N = 2           # batch
DIM_IN = 8      # dim_in
DIM_OUT = 16    # dim_out (dim_in != dim_out -> a_head is a 1x1 projection)
DIM_INNER = 8   # dim_inner
H = 16          # temporal extent
W = 16          # frequency extent
T_K = 11        # temp_kernel_size
F_K = 11        # freq_kernel_size


def _is_pow2(v):
    return v > 0 and (v & (v - 1)) == 0


# ---------------------------------------------------------------------------
# Pallas kernel: single invocation, whole problem resident in VMEM
# ---------------------------------------------------------------------------
def _bottleneck_kernel(x_ref, slab_ref, o_ref, *, height, width, t_k, f_k):
    n_img, cin, hw = x_ref.shape          # (N, Cin, H*W)
    cout = o_ref.shape[1]
    nhw = n_img * hw
    t_pad = t_k // 2
    f_pad = f_k // 2

    # ---- unpack the packed constant slab (static lane offsets) -------------
    slab = slab_ref[...]                                   # (Cout, 128) f32
    c0 = 0
    w_head = slab[:, c0:c0 + cin]; c0 += cin               # (Cout, Cin)
    wa = slab[:, c0:c0 + t_k]; c0 += t_k                   # (Cout, T_K)
    wb = slab[:, c0:c0 + f_k]; c0 += f_k                   # (Cout, F_K)
    wc16 = slab[:, c0:c0 + cout]; c0 += cout               # (Cout, Cout), rows >= Cinner zero
    wd16 = slab[:, c0:c0 + cout]; c0 += cout               # (Cout, Cout), cols >= Cinner zero
    head_shift = slab[:, c0 + 0:c0 + 1]
    a_bias = slab[:, c0 + 1:c0 + 2]
    b_bias = slab[:, c0 + 2:c0 + 3]
    c_shift = slab[:, c0 + 3:c0 + 4]
    d_shift = slab[:, c0 + 4:c0 + 5]

    # ---- fold the batch onto the lane axis (hw-aligned concat) -------------
    x = jnp.concatenate([x_ref[i] for i in range(n_img)], axis=1)  # (Cin, N*HW)

    # ---- boundary masks from a flat lane iota (no mask DMA) ----------------
    lane = jax.lax.broadcasted_iota(jnp.int32, (1, nhw), 1)
    if _is_pow2(hw) and _is_pow2(width):
        col = lane & (width - 1)                            # freq position in row
        row = (lane & (hw - 1)) >> (width.bit_length() - 1)  # temp position in image
    else:  # non power-of-two spatial dims (not exercised in this script)
        col = lane % width
        row = (lane % hw) // width

    # ---- a_head: 1x1 conv (BN scale pre-folded) + shift + ReLU -------------
    x_head = jnp.maximum(
        jnp.dot(w_head, x, preferred_element_type=jnp.float32) + head_shift,
        0.0)                                                # (Cout, N*HW)

    # ---- stage A: merged depthwise (t_k x 1) conv + residual + ReLU --------
    # Each tap is a lane roll by a multiple of `width`; the row-bound mask
    # implements the zero padding AND kills cross-image / wraparound leakage.
    acc = x_head + a_bias
    for t in range(t_k):
        off = t - t_pad
        if off == 0:
            acc = acc + wa[:, t:t + 1] * x_head
            continue
        v = pltpu.roll(x_head, shift=(-off * width) % nhw, axis=1)
        valid = (row < height - off) if off > 0 else (row >= -off)
        acc = acc + wa[:, t:t + 1] * jnp.where(valid, v, 0.0)
    x_comb_1 = jnp.maximum(acc, 0.0)

    # ---- stage B: merged depthwise (1 x f_k) conv + residual + ReLU --------
    acc = x_comb_1 + b_bias
    for t in range(f_k):
        off = t - f_pad
        if off == 0:
            acc = acc + wb[:, t:t + 1] * x_comb_1
            continue
        v = pltpu.roll(x_comb_1, shift=(-off) % nhw, axis=1)
        valid = (col < width - off) if off > 0 else (col >= -off)
        acc = acc + wb[:, t:t + 1] * jnp.where(valid, v, 0.0)
    x_comb_2 = jnp.maximum(acc, 0.0)

    # ---- c: 1x1 -> dim_inner (zero-padded rows stay 0 after ReLU) ----------
    xc = jnp.maximum(
        jnp.dot(wc16, x_comb_2, preferred_element_type=jnp.float32) + c_shift,
        0.0)

    # ---- d: 1x1 -> dim_out with final BN folded ----------------------------
    out = jnp.dot(wd16, xc, preferred_element_type=jnp.float32) + d_shift

    # ---- unfold the batch: aligned lane slices, unmasked (Cout, HW) stores --
    for i in range(n_img):
        o_ref[i] = out[:, i * hw:(i + 1) * hw]


# ---------------------------------------------------------------------------
# Wrapper: NCHW in/out (pure reshapes), BN folding + single packed weight slab
# ---------------------------------------------------------------------------
@jax.jit
def ms_threeway_dw_bottleneck(x_nchw, params):
    n, cin, h, w = x_nchw.shape
    hw = h * w
    x = x_nchw.reshape(n, cin, hw).astype(jnp.float32)

    sc, sh = params["sc_out"], params["sh_out"]        # (8, Cout), (8, Cout)
    cout = params["w_head"].shape[0]
    cinner = params["wc"].shape[0]
    t_k = params["wa"].shape[1]
    f_k = params["wb"].shape[1]

    def pad_center(wk, k_full):                        # (C, k) -> (C, k_full)
        p = (k_full - wk.shape[1]) // 2
        return jnp.pad(wk, ((0, 0), (p, p)))

    # Fold BN scales into conv weights; merge the 3 depthwise branches/stage.
    w_head_eff = params["w_head"] * sc[0][:, None]                 # (Cout, Cin)
    wa_eff = (params["wa"] * sc[1][:, None]
              + pad_center(params["wa_med"], t_k) * sc[2][:, None]
              + pad_center(params["wa_small"], t_k) * sc[3][:, None])
    wb_eff = (params["wb"] * sc[4][:, None]
              + pad_center(params["wb_med"], f_k) * sc[5][:, None]
              + pad_center(params["wb_small"], f_k) * sc[6][:, None])
    # c / d 1x1 convs zero-padded to (Cout, Cout) so no in-kernel transposes
    # or sub-8 sublane shapes are needed (extra K terms are exact zeros).
    wc16 = jnp.zeros((cout, cout), jnp.float32).at[:cinner, :].set(
        params["wc"] * params["sc_c"][:, None])
    wd16 = jnp.zeros((cout, cout), jnp.float32).at[:, :cinner].set(
        params["wd"] * sc[7][:, None])

    c_shift = jnp.zeros((cout,), jnp.float32).at[:cinner].set(params["sh_c"])
    bias = jnp.stack(
        [sh[0], sh[1] + sh[2] + sh[3], sh[4] + sh[5] + sh[6], c_shift, sh[7]],
        axis=1)                                                    # (Cout, 5)

    # One packed, lane-padded constant slab -> a single weight DMA.
    slab = jnp.concatenate(
        [w_head_eff, wa_eff, wb_eff, wc16, wd16, bias], axis=1)
    lanes = max(128, -(-slab.shape[1] // 128) * 128)
    slab = jnp.pad(slab, ((0, 0), (0, lanes - slab.shape[1]))).astype(jnp.float32)

    kernel = functools.partial(
        _bottleneck_kernel, height=h, width=w, t_k=t_k, f_k=f_k)

    # Single invocation (no grid): x, the slab, and every intermediate fit in
    # VMEM together, so there is nothing to pipeline and only 2 input DMAs.
    out = pl.pallas_call(
        kernel,
        out_shape=jax.ShapeDtypeStruct((n, cout, hw), jnp.float32),
    )(x, slab)

    return out.reshape(n, cout, h, w)   # NCHW, like the PyTorch module


# ---------------------------------------------------------------------------
# Deterministic parameter construction (synthetic; eval-mode BN as scale/shift)
# ---------------------------------------------------------------------------
def make_params(key):
    counter = iter(range(1, 1000))

    def nkey():
        return jax.random.fold_in(key, next(counter))

    def nrm(shape, scale):
        return (scale * jax.random.normal(nkey(), shape)).astype(jnp.float32)

    def bn_fold(c, eps=1e-5):
        gamma = 1.0 + 0.1 * jax.random.normal(nkey(), (c,))
        beta = 0.1 * jax.random.normal(nkey(), (c,))
        mean = 0.1 * jax.random.normal(nkey(), (c,))
        var = jax.random.uniform(nkey(), (c,), minval=0.5, maxval=1.5)
        scale = gamma / jnp.sqrt(var + eps)
        shift = beta - mean * scale
        return scale.astype(jnp.float32), shift.astype(jnp.float32)

    p = {}
    # 1x1 convs in PyTorch orientation (C_out, C_in) (== weight[:, :, 0, 0]).
    p["w_head"] = nrm((DIM_OUT, DIM_IN), (2.0 / DIM_IN) ** 0.5)
    p["wc"] = nrm((DIM_INNER, DIM_OUT), (2.0 / DIM_OUT) ** 0.5)
    p["wd"] = nrm((DIM_OUT, DIM_INNER), (2.0 / DIM_INNER) ** 0.5)
    # depthwise kernels as (C, K): wa[c, t] == torch_weight[c, 0, t, 0].
    p["wa"] = nrm((DIM_OUT, T_K), 0.2)
    p["wa_med"] = nrm((DIM_OUT, 11), 0.2)
    p["wa_small"] = nrm((DIM_OUT, 3), 0.2)
    p["wb"] = nrm((DIM_OUT, F_K), 0.2)
    p["wb_med"] = nrm((DIM_OUT, 11), 0.2)
    p["wb_small"] = nrm((DIM_OUT, 3), 0.2)
    # Eval-mode BNs folded to (scale, shift); row order:
    # [a_head_bn, a_bn, a_bn_medium, a_bn_small, b_bn, b_bn_medium, b_bn_small, d_bn]
    scales, shifts = [], []
    for _ in range(8):
        s, b = bn_fold(DIM_OUT)
        scales.append(s)
        shifts.append(b)
    p["sc_out"] = jnp.stack(scales)
    p["sh_out"] = jnp.stack(shifts)
    p["sc_c"], p["sh_c"] = bn_fold(DIM_INNER)
    return p


# ---------------------------------------------------------------------------
# Pure-JAX reference (un-fused, mirrors the PyTorch module) for validation
# ---------------------------------------------------------------------------
def reference_forward(x_nchw, p):
    x = jnp.transpose(x_nchw, (0, 2, 3, 1)).astype(jnp.float32)  # NHWC

    def bn(v, i):
        return v * p["sc_out"][i] + p["sh_out"][i]

    def dw(v, wck, axis):   # wck: (C, k) depthwise kernel
        c, k = wck.shape
        if axis == 0:
            kern = wck.T.reshape(k, 1, 1, c)
            pad = ((k // 2, k // 2), (0, 0))
        else:
            kern = wck.T.reshape(1, k, 1, c)
            pad = ((0, 0), (k // 2, k // 2))
        return jax.lax.conv_general_dilated(
            v, kern, (1, 1), pad,
            dimension_numbers=("NHWC", "HWIO", "NHWC"),
            feature_group_count=c)

    xh = jax.nn.relu(bn(jnp.einsum("nhwc,dc->nhwd", x, p["w_head"]), 0))
    a = (bn(dw(xh, p["wa"], 0), 1) + bn(dw(xh, p["wa_med"], 0), 2)
         + bn(dw(xh, p["wa_small"], 0), 3))
    xc1 = jax.nn.relu(a + xh)
    b = (bn(dw(xc1, p["wb"], 1), 4) + bn(dw(xc1, p["wb_med"], 1), 5)
         + bn(dw(xc1, p["wb_small"], 1), 6))
    xc2 = jax.nn.relu(b + xc1)
    xc = jax.nn.relu(jnp.einsum("nhwc,dc->nhwd", xc2, p["wc"]) * p["sc_c"]
                     + p["sh_c"])
    out = bn(jnp.einsum("nhwc,dc->nhwd", xc, p["wd"]), 7)
    return jnp.transpose(out, (0, 3, 1, 2))  # NCHW


if __name__ == "__main__":
    key = jax.random.PRNGKey(0)
    k_x, k_p = jax.random.split(key)
    x = jax.random.normal(k_x, (N, DIM_IN, H, W), dtype=jnp.float32)  # NCHW
    params = make_params(k_p)

    out = jax.block_until_ready(ms_threeway_dw_bottleneck(x, params))
    ref = jax.block_until_ready(reference_forward(x, params))

    if not np.allclose(np.asarray(out), np.asarray(ref), rtol=2e-2, atol=2e-2):
        diff = float(np.max(np.abs(np.asarray(out) - np.asarray(ref))))
        raise AssertionError(
            f"Pallas output mismatch vs reference, max abs diff = {diff}")

    print("KERNEL_OK")
</pallas_src>

<mosaic_0001>
module attributes {stable_mosaic.version = 11 : i64} {
  func.func @_bottleneck_kernel(%arg0: memref<2x8x256xf32, #tpu.memory_space<vmem>>, %arg1: memref<16x128xf32, #tpu.memory_space<vmem>>, %arg2: memref<2x16x256xf32, #tpu.memory_space<vmem>>) attributes {dimension_semantics = [], scalar_prefetch = 0 : i64, scratch_operands = 0 : i64, tpu.core_type = #tpu.core_type<tc>} {
    %c0 = arith.constant 0 : index
    %c0_0 = arith.constant 0 : index
    %0 = vector.load %arg1[%c0, %c0_0] : memref<16x128xf32, #tpu.memory_space<vmem>>, vector<16x128xf32>
    %1 = vector.extract_strided_slice %0 {offsets = [0, 0], sizes = [16, 8], strides = [1, 1]} : vector<16x128xf32> to vector<16x8xf32>
    %2 = vector.extract_strided_slice %0 {offsets = [0, 8], sizes = [16, 11], strides = [1, 1]} : vector<16x128xf32> to vector<16x11xf32>
    %3 = vector.extract_strided_slice %0 {offsets = [0, 19], sizes = [16, 11], strides = [1, 1]} : vector<16x128xf32> to vector<16x11xf32>
    %4 = vector.extract_strided_slice %0 {offsets = [0, 30], sizes = [16, 16], strides = [1, 1]} : vector<16x128xf32> to vector<16x16xf32>
    %5 = vector.extract_strided_slice %0 {offsets = [0, 46], sizes = [16, 16], strides = [1, 1]} : vector<16x128xf32> to vector<16x16xf32>
    %6 = vector.extract_strided_slice %0 {offsets = [0, 62], sizes = [16, 1], strides = [1, 1]} : vector<16x128xf32> to vector<16x1xf32>
    %7 = vector.extract_strided_slice %0 {offsets = [0, 63], sizes = [16, 1], strides = [1, 1]} : vector<16x128xf32> to vector<16x1xf32>
    %8 = vector.extract_strided_slice %0 {offsets = [0, 64], sizes = [16, 1], strides = [1, 1]} : vector<16x128xf32> to vector<16x1xf32>
    %9 = vector.extract_strided_slice %0 {offsets = [0, 65], sizes = [16, 1], strides = [1, 1]} : vector<16x128xf32> to vector<16x1xf32>
    %10 = vector.extract_strided_slice %0 {offsets = [0, 66], sizes = [16, 1], strides = [1, 1]} : vector<16x128xf32> to vector<16x1xf32>
    %c0_1 = arith.constant 0 : index
    %c0_2 = arith.constant 0 : index
    %c0_3 = arith.constant 0 : index
    %11 = vector.load %arg0[%c0_1, %c0_2, %c0_3] : memref<2x8x256xf32, #tpu.memory_space<vmem>>, vector<1x8x256xf32>
    %12 = vector.shape_cast %11 : vector<1x8x256xf32> to vector<8x256xf32>
    %c1 = arith.constant 1 : index
    %c0_4 = arith.constant 0 : index
    %c0_5 = arith.constant 0 : index
    %13 = vector.load %arg0[%c1, %c0_4, %c0_5] : memref<2x8x256xf32, #tpu.memory_space<vmem>>, vector<1x8x256xf32>
    %14 = vector.shape_cast %13 : vector<1x8x256xf32> to vector<8x256xf32>
    %15 = tpu.concatenate %12, %14 in 1 : vector<8x256xf32>, vector<8x256xf32> -> vector<8x512xf32>
    %16 = tpu.iota {dimensions = array<i32: 1>} : vector<1x512xi32>
    %c15_i32 = arith.constant 15 : i32
    %17 = vector.broadcast %c15_i32 : i32 to vector<1x512xi32>
    %18 = arith.andi %16, %17 : vector<1x512xi32>
    %c255_i32 = arith.constant 255 : i32
    %19 = vector.broadcast %c255_i32 : i32 to vector<1x512xi32>
    %20 = arith.andi %16, %19 : vector<1x512xi32>
    %c4_i32 = arith.constant 4 : i32
    %21 = vector.broadcast %c4_i32 : i32 to vector<1x512xi32>
    %22 = arith.shrsi %20, %21 : vector<1x512xi32>
    %cst = arith.constant dense<0.000000e+00> : vector<16x512xf32>
    %23 = tpu.matmul %1, %15, %cst {dimension_numbers = #tpu.dot_dimension_numbers<[1], [0], [0], [1], [0, 0, 1, 1], [], []>} : vector<16x8xf32>, vector<8x512xf32>, vector<16x512xf32> -> vector<16x512xf32>
    %24 = vector.broadcast %6 : vector<16x1xf32> to vector<16x512xf32>
    %25 = arith.addf %23, %24 : vector<16x512xf32>
    %cst_6 = arith.constant 0.000000e+00 : f32
    %26 = vector.broadcast %cst_6 : f32 to vector<16x512xf32>
    %27 = arith.maximumf %25, %26 : vector<16x512xf32>
    %28 = vector.broadcast %7 : vector<16x1xf32> to vector<16x512xf32>
    %29 = arith.addf %27, %28 : vector<16x512xf32>
    %c80_i32 = arith.constant 80 : i32
    %30 = tpu.dynamic_rotate %27 by %c80_i32 dim 1 : vector<16x512xf32>, i32 -> vector<16x512xf32>
    %c5_i32 = arith.constant 5 : i32
    %31 = vector.broadcast %c5_i32 : i32 to vector<1x512xi32>
    %32 = arith.cmpi sge, %22, %31 : vector<1x512xi32>
    %33 = vector.extract_strided_slice %2 {offsets = [0, 0], sizes = [16, 1], strides = [1, 1]} : vector<16x11xf32> to vector<16x1xf32>
    %cst_7 = arith.constant 0.000000e+00 : f32
    %34 = vector.shape_cast %32 : vector<1x512xi1> to vector<1x512xi1>
    %35 = vector.broadcast %34 : vector<1x512xi1> to vector<16x512xi1>
    %36 = vector.broadcast %cst_7 : f32 to vector<16x512xf32>
    %37 = arith.select %35, %30, %36 : vector<16x512xi1>, vector<16x512xf32>
    %38 = vector.broadcast %33 : vector<16x1xf32> to vector<16x512xf32>
    %39 = arith.mulf %38, %37 : vector<16x512xf32>
    %40 = arith.addf %29, %39 : vector<16x512xf32>
    %c64_i32 = arith.constant 64 : i32
    %41 = tpu.dynamic_rotate %27 by %c64_i32 dim 1 : vector<16x512xf32>, i32 -> vector<16x512xf32>
    %c4_i32_8 = arith.constant 4 : i32
    %42 = vector.broadcast %c4_i32_8 : i32 to vector<1x512xi32>
    %43 = arith.cmpi sge, %22, %42 : vector<1x512xi32>
    %44 = vector.extract_strided_slice %2 {offsets = [0, 1], sizes = [16, 1], strides = [1, 1]} : vector<16x11xf32> to vector<16x1xf32>
    %cst_9 = arith.constant 0.000000e+00 : f32
    %45 = vector.shape_cast %43 : vector<1x512xi1> to vector<1x512xi1>
    %46 = vector.broadcast %45 : vector<1x512xi1> to vector<16x512xi1>
    %47 = vector.broadcast %cst_9 : f32 to vector<16x512xf32>
    %48 = arith.select %46, %41, %47 : vector<16x512xi1>, vector<16x512xf32>
    %49 = vector.broadcast %44 : vector<16x1xf32> to vector<16x512xf32>
    %50 = arith.mulf %49, %48 : vector<16x512xf32>
    %51 = arith.addf %40, %50 : vector<16x512xf32>
    %c48_i32 = arith.constant 48 : i32
    %52 = tpu.dynamic_rotate %27 by %c48_i32 dim 1 : vector<16x512xf32>, i32 -> vector<16x512xf32>
    %c3_i32 = arith.constant 3 : i32
    %53 = vector.broadcast %c3_i32 : i32 to vector<1x512xi32>
    %54 = arith.cmpi sge, %22, %53 : vector<1x512xi32>
    %55 = vector.extract_strided_slice %2 {offsets = [0, 2], sizes = [16, 1], strides = [1, 1]} : vector<16x11xf32> to vector<16x1xf32>
    %cst_10 = arith.constant 0.000000e+00 : f32
    %56 = vector.shape_cast %54 : vector<1x512xi1> to vector<1x512xi1>
    %57 = vector.broadcast %56 : vector<1x512xi1> to vector<16x512xi1>
    %58 = vector.broadcast %cst_10 : f32 to vector<16x512xf32>
    %59 = arith.select %57, %52, %58 : vector<16x512xi1>, vector<16x512xf32>
    %60 = vector.broadcast %55 : vector<16x1xf32> to vector<16x512xf32>
    %61 = arith.mulf %60, %59 : vector<16x512xf32>
    %62 = arith.addf %51, %61 : vector<16x512xf32>
    %c32_i32 = arith.constant 32 : i32
    %63 = tpu.dynamic_rotate %27 by %c32_i32 dim 1 : vector<16x512xf32>, i32 -> vector<16x512xf32>
    %c2_i32 = arith.constant 2 : i32
    %64 = vector.broadcast %c2_i32 : i32 to vector<1x512xi32>
    %65 = arith.cmpi sge, %22, %64 : vector<1x512xi32>
    %66 = vector.extract_strided_slice %2 {offsets = [0, 3], sizes = [16, 1], strides = [1, 1]} : vector<16x11xf32> to vector<16x1xf32>
    %cst_11 = arith.constant 0.000000e+00 : f32
    %67 = vector.shape_cast %65 : vector<1x512xi1> to vector<1x512xi1>
    %68 = vector.broadcast %67 : vector<1x512xi1> to vector<16x512xi1>
    %69 = vector.broadcast %cst_11 : f32 to vector<16x512xf32>
    %70 = arith.select %68, %63, %69 : vector<16x512xi1>, vector<16x512xf32>
    %71 = vector.broadcast %66 : vector<16x1xf32> to vector<16x512xf32>
    %72 = arith.mulf %71, %70 : vector<16x512xf32>
    %73 = arith.addf %62, %72 : vector<16x512xf32>
    %c16_i32 = arith.constant 16 : i32
    %74 = tpu.dynamic_rotate %27 by %c16_i32 dim 1 : vector<16x512xf32>, i32 -> vector<16x512xf32>
    %c1_i32 = arith.constant 1 : i32
    %75 = vector.broadcast %c1_i32 : i32 to vector<1x512xi32>
    %76 = arith.cmpi sge, %22, %75 : vector<1x512xi32>
    %77 = vector.extract_strided_slice %2 {offsets = [0, 4], sizes = [16, 1], strides = [1, 1]} : vector<16x11xf32> to vector<16x1xf32>
    %cst_12 = arith.constant 0.000000e+00 : f32
    %78 = vector.shape_cast %76 : vector<1x512xi1> to vector<1x512xi1>
    %79 = vector.broadcast %78 : vector<1x512xi1> to vector<16x512xi1>
    %80 = vector.broadcast %cst_12 : f32 to vector<16x512xf32>
    %81 = arith.select %79, %74, %80 : vector<16x512xi1>, vector<16x512xf32>
    %82 = vector.broadcast %77 : vector<16x1xf32> to vector<16x512xf32>
    %83 = arith.mulf %82, %81 : vector<16x512xf32>
    %84 = arith.addf %73, %83 : vector<16x512xf32>
    %85 = vector.extract_strided_slice %2 {offsets = [0, 5], sizes = [16, 1], strides = [1, 1]} : vector<16x11xf32> to vector<16x1xf32>
    %86 = vector.broadcast %85 : vector<16x1xf32> to vector<16x512xf32>
    %87 = arith.mulf %86, %27 : vector<16x512xf32>
    %88 = arith.addf %84, %87 : vector<16x512xf32>
    %c496_i32 = arith.constant 496 : i32
    %89 = tpu.dynamic_rotate %27 by %c496_i32 dim 1 : vector<16x512xf32>, i32 -> vector<16x512xf32>
    %c15_i32_13 = arith.constant 15 : i32
    %90 = vector.broadcast %c15_i32_13 : i32 to vector<1x512xi32>
    %91 = arith.cmpi slt, %22, %90 : vector<1x512xi32>
    %92 = vector.extract_strided_slice %2 {offsets = [0, 6], sizes = [16, 1], strides = [1, 1]} : vector<16x11xf32> to vector<16x1xf32>
    %cst_14 = arith.constant 0.000000e+00 : f32
    %93 = vector.shape_cast %91 : vector<1x512xi1> to vector<1x512xi1>
    %94 = vector.broadcast %93 : vector<1x512xi1> to vector<16x512xi1>
    %95 = vector.broadcast %cst_14 : f32 to vector<16x512xf32>
    %96 = arith.select %94, %89, %95 : vector<16x512xi1>, vector<16x512xf32>
    %97 = vector.broadcast %92 : vector<16x1xf32> to vector<16x512xf32>
    %98 = arith.mulf %97, %96 : vector<16x512xf32>
    %99 = arith.addf %88, %98 : vector<16x512xf32>
    %c480_i32 = arith.constant 480 : i32
    %100 = tpu.dynamic_rotate %27 by %c480_i32 dim 1 : vector<16x512xf32>, i32 -> vector<16x512xf32>
    %c14_i32 = arith.constant 14 : i32
    %101 = vector.broadcast %c14_i32 : i32 to vector<1x512xi32>
    %102 = arith.cmpi slt, %22, %101 : vector<1x512xi32>
    %103 = vector.extract_strided_slice %2 {offsets = [0, 7], sizes = [16, 1], strides = [1, 1]} : vector<16x11xf32> to vector<16x1xf32>
    %cst_15 = arith.constant 0.000000e+00 : f32
    %104 = vector.shape_cast %102 : vector<1x512xi1> to vector<1x512xi1>
    %105 = vector.broadcast %104 : vector<1x512xi1> to vector<16x512xi1>
    %106 = vector.broadcast %cst_15 : f32 to vector<16x512xf32>
    %107 = arith.select %105, %100, %106 : vector<16x512xi1>, vector<16x512xf32>
    %108 = vector.broadcast %103 : vector<16x1xf32> to vector<16x512xf32>
    %109 = arith.mulf %108, %107 : vector<16x512xf32>
    %110 = arith.addf %99, %109 : vector<16x512xf32>
    %c464_i32 = arith.constant 464 : i32
    %111 = tpu.dynamic_rotate %27 by %c464_i32 dim 1 : vector<16x512xf32>, i32 -> vector<16x512xf32>
    %c13_i32 = arith.constant 13 : i32
    %112 = vector.broadcast %c13_i32 : i32 to vector<1x512xi32>
    %113 = arith.cmpi slt, %22, %112 : vector<1x512xi32>
    %114 = vector.extract_strided_slice %2 {offsets = [0, 8], sizes = [16, 1], strides = [1, 1]} : vector<16x11xf32> to vector<16x1xf32>
    %cst_16 = arith.constant 0.000000e+00 : f32
    %115 = vector.shape_cast %113 : vector<1x512xi1> to vector<1x512xi1>
    %116 = vector.broadcast %115 : vector<1x512xi1> to vector<16x512xi1>
    %117 = vector.broadcast %cst_16 : f32 to vector<16x512xf32>
    %118 = arith.select %116, %111, %117 : vector<16x512xi1>, vector<16x512xf32>
    %119 = vector.broadcast %114 : vector<16x1xf32> to vector<16x512xf32>
    %120 = arith.mulf %119, %118 : vector<16x512xf32>
    %121 = arith.addf %110, %120 : vector<16x512xf32>
    %c448_i32 = arith.constant 448 : i32
    %122 = tpu.dynamic_rotate %27 by %c448_i32 dim 1 : vector<16x512xf32>, i32 -> vector<16x512xf32>
    %c12_i32 = arith.constant 12 : i32
    %123 = vector.broadcast %c12_i32 : i32 to vector<1x512xi32>
    %124 = arith.cmpi slt, %22, %123 : vector<1x512xi32>
    %125 = vector.extract_strided_slice %2 {offsets = [0, 9], sizes = [16, 1], strides = [1, 1]} : vector<16x11xf32> to vector<16x1xf32>
    %cst_17 = arith.constant 0.000000e+00 : f32
    %126 = vector.shape_cast %124 : vector<1x512xi1> to vector<1x512xi1>
    %127 = vector.broadcast %126 : vector<1x512xi1> to vector<16x512xi1>
    %128 = vector.broadcast %cst_17 : f32 to vector<16x512xf32>
    %129 = arith.select %127, %122, %128 : vector<16x512xi1>, vector<16x512xf32>
    %130 = vector.broadcast %125 : vector<16x1xf32> to vector<16x512xf32>
    %131 = arith.mulf %130, %129 : vector<16x512xf32>
    %132 = arith.addf %121, %131 : vector<16x512xf32>
    %c432_i32 = arith.constant 432 : i32
    %133 = tpu.dynamic_rotate %27 by %c432_i32 dim 1 : vector<16x512xf32>, i32 -> vector<16x512xf32>
    %c11_i32 = arith.constant 11 : i32
    %134 = vector.broadcast %c11_i32 : i32 to vector<1x512xi32>
    %135 = arith.cmpi slt, %22, %134 : vector<1x512xi32>
    %136 = vector.extract_strided_slice %2 {offsets = [0, 10], sizes = [16, 1], strides = [1, 1]} : vector<16x11xf32> to vector<16x1xf32>
    %cst_18 = arith.constant 0.000000e+00 : f32
    %137 = vector.shape_cast %135 : vector<1x512xi1> to vector<1x512xi1>
    %138 = vector.broadcast %137 : vector<1x512xi1> to vector<16x512xi1>
    %139 = vector.broadcast %cst_18 : f32 to vector<16x512xf32>
    %140 = arith.select %138, %133, %139 : vector<16x512xi1>, vector<16x512xf32>
    %141 = vector.broadcast %136 : vector<16x1xf32> to vector<16x512xf32>
    %142 = arith.mulf %141, %140 : vector<16x512xf32>
    %143 = arith.addf %132, %142 : vector<16x512xf32>
    %cst_19 = arith.constant 0.000000e+00 : f32
    %144 = vector.broadcast %cst_19 : f32 to vector<16x512xf32>
    %145 = arith.maximumf %143, %144 : vector<16x512xf32>
    %146 = vector.broadcast %8 : vector<16x1xf32> to vector<16x512xf32>
    %147 = arith.addf %145, %146 : vector<16x512xf32>
    %c5_i32_20 = arith.constant 5 : i32
    %148 = tpu.dynamic_rotate %145 by %c5_i32_20 dim 1 : vector<16x512xf32>, i32 -> vector<16x512xf32>
    %c5_i32_21 = arith.constant 5 : i32
    %149 = vector.broadcast %c5_i32_21 : i32 to vector<1x512xi32>
    %150 = arith.cmpi sge, %18, %149 : vector<1x512xi32>
    %151 = vector.extract_strided_slice %3 {offsets = [0, 0], sizes = [16, 1], strides = [1, 1]} : vector<16x11xf32> to vector<16x1xf32>
    %cst_22 = arith.constant 0.000000e+00 : f32
    %152 = vector.shape_cast %150 : vector<1x512xi1> to vector<1x512xi1>
    %153 = vector.broadcast %152 : vector<1x512xi1> to vector<16x512xi1>
    %154 = vector.broadcast %cst_22 : f32 to vector<16x512xf32>
    %155 = arith.select %153, %148, %154 : vector<16x512xi1>, vector<16x512xf32>
    %156 = vector.broadcast %151 : vector<16x1xf32> to vector<16x512xf32>
    %157 = arith.mulf %156, %155 : vector<16x512xf32>
    %158 = arith.addf %147, %157 : vector<16x512xf32>
    %c4_i32_23 = arith.constant 4 : i32
    %159 = tpu.dynamic_rotate %145 by %c4_i32_23 dim 1 : vector<16x512xf32>, i32 -> vector<16x512xf32>
    %c4_i32_24 = arith.constant 4 : i32
    %160 = vector.broadcast %c4_i32_24 : i32 to vector<1x512xi32>
    %161 = arith.cmpi sge, %18, %160 : vector<1x512xi32>
    %162 = vector.extract_strided_slice %3 {offsets = [0, 1], sizes = [16, 1], strides = [1, 1]} : vector<16x11xf32> to vector<16x1xf32>
    %cst_25 = arith.constant 0.000000e+00 : f32
    %163 = vector.shape_cast %161 : vector<1x512xi1> to vector<1x512xi1>
    %164 = vector.broadcast %163 : vector<1x512xi1> to vector<16x512xi1>
    %165 = vector.broadcast %cst_25 : f32 to vector<16x512xf32>
    %166 = arith.select %164, %159, %165 : vector<16x512xi1>, vector<16x512xf32>
    %167 = vector.broadcast %162 : vector<16x1xf32> to vector<16x512xf32>
    %168 = arith.mulf %167, %166 : vector<16x512xf32>
    %169 = arith.addf %158, %168 : vector<16x512xf32>
    %c3_i32_26 = arith.constant 3 : i32
    %170 = tpu.dynamic_rotate %145 by %c3_i32_26 dim 1 : vector<16x512xf32>, i32 -> vector<16x512xf32>
    %c3_i32_27 = arith.constant 3 : i32
    %171 = vector.broadcast %c3_i32_27 : i32 to vector<1x512xi32>
    %172 = arith.cmpi sge, %18, %171 : vector<1x512xi32>
    %173 = vector.extract_strided_slice %3 {offsets = [0, 2], sizes = [16, 1], strides = [1, 1]} : vector<16x11xf32> to vector<16x1xf32>
    %cst_28 = arith.constant 0.000000e+00 : f32
    %174 = vector.shape_cast %172 : vector<1x512xi1> to vector<1x512xi1>
    %175 = vector.broadcast %174 : vector<1x512xi1> to vector<16x512xi1>
    %176 = vector.broadcast %cst_28 : f32 to vector<16x512xf32>
    %177 = arith.select %175, %170, %176 : vector<16x512xi1>, vector<16x512xf32>
    %178 = vector.broadcast %173 : vector<16x1xf32> to vector<16x512xf32>
    %179 = arith.mulf %178, %177 : vector<16x512xf32>
    %180 = arith.addf %169, %179 : vector<16x512xf32>
    %c2_i32_29 = arith.constant 2 : i32
    %181 = tpu.dynamic_rotate %145 by %c2_i32_29 dim 1 : vector<16x512xf32>, i32 -> vector<16x512xf32>
    %c2_i32_30 = arith.constant 2 : i32
    %182 = vector.broadcast %c2_i32_30 : i32 to vector<1x512xi32>
    %183 = arith.cmpi sge, %18, %182 : vector<1x512xi32>
    %184 = vector.extract_strided_slice %3 {offsets = [0, 3], sizes = [16, 1], strides = [1, 1]} : vector<16x11xf32> to vector<16x1xf32>
    %cst_31 = arith.constant 0.000000e+00 : f32
    %185 = vector.shape_cast %183 : vector<1x512xi1> to vector<1x512xi1>
    %186 = vector.broadcast %185 : vector<1x512xi1> to vector<16x512xi1>
    %187 = vector.broadcast %cst_31 : f32 to vector<16x512xf32>
    %188 = arith.select %186, %181, %187 : vector<16x512xi1>, vector<16x512xf32>
    %189 = vector.broadcast %184 : vector<16x1xf32> to vector<16x512xf32>
    %190 = arith.mulf %189, %188 : vector<16x512xf32>
    %191 = arith.addf %180, %190 : vector<16x512xf32>
    %c1_i32_32 = arith.constant 1 : i32
    %192 = tpu.dynamic_rotate %145 by %c1_i32_32 dim 1 : vector<16x512xf32>, i32 -> vector<16x512xf32>
    %c1_i32_33 = arith.constant 1 : i32
    %193 = vector.broadcast %c1_i32_33 : i32 to vector<1x512xi32>
    %194 = arith.cmpi sge, %18, %193 : vector<1x512xi32>
    %195 = vector.extract_strided_slice %3 {offsets = [0, 4], sizes = [16, 1], strides = [1, 1]} : vector<16x11xf32> to vector<16x1xf32>
    %cst_34 = arith.constant 0.000000e+00 : f32
    %196 = vector.shape_cast %194 : vector<1x512xi1> to vector<1x512xi1>
    %197 = vector.broadcast %196 : vector<1x512xi1> to vector<16x512xi1>
    %198 = vector.broadcast %cst_34 : f32 to vector<16x512xf32>
    %199 = arith.select %197, %192, %198 : vector<16x512xi1>, vector<16x512xf32>
    %200 = vector.broadcast %195 : vector<16x1xf32> to vector<16x512xf32>
    %201 = arith.mulf %200, %199 : vector<16x512xf32>
    %202 = arith.addf %191, %201 : vector<16x512xf32>
    %203 = vector.extract_strided_slice %3 {offsets = [0, 5], sizes = [16, 1], strides = [1, 1]} : vector<16x11xf32> to vector<16x1xf32>
    %204 = vector.broadcast %203 : vector<16x1xf32> to vector<16x512xf32>
    %205 = arith.mulf %204, %145 : vector<16x512xf32>
    %206 = arith.addf %202, %205 : vector<16x512xf32>
    %c511_i32 = arith.constant 511 : i32
    %207 = tpu.dynamic_rotate %145 by %c511_i32 dim 1 : vector<16x512xf32>, i32 -> vector<16x512xf32>
    %c15_i32_35 = arith.constant 15 : i32
    %208 = vector.broadcast %c15_i32_35 : i32 to vector<1x512xi32>
    %209 = arith.cmpi slt, %18, %208 : vector<1x512xi32>
    %210 = vector.extract_strided_slice %3 {offsets = [0, 6], sizes = [16, 1], strides = [1, 1]} : vector<16x11xf32> to vector<16x1xf32>
    %cst_36 = arith.constant 0.000000e+00 : f32
    %211 = vector.shape_cast %209 : vector<1x512xi1> to vector<1x512xi1>
    %212 = vector.broadcast %211 : vector<1x512xi1> to vector<16x512xi1>
    %213 = vector.broadcast %cst_36 : f32 to vector<16x512xf32>
    %214 = arith.select %212, %207, %213 : vector<16x512xi1>, vector<16x512xf32>
    %215 = vector.broadcast %210 : vector<16x1xf32> to vector<16x512xf32>
    %216 = arith.mulf %215, %214 : vector<16x512xf32>
    %217 = arith.addf %206, %216 : vector<16x512xf32>
    %c510_i32 = arith.constant 510 : i32
    %218 = tpu.dynamic_rotate %145 by %c510_i32 dim 1 : vector<16x512xf32>, i32 -> vector<16x512xf32>
    %c14_i32_37 = arith.constant 14 : i32
    %219 = vector.broadcast %c14_i32_37 : i32 to vector<1x512xi32>
    %220 = arith.cmpi slt, %18, %219 : vector<1x512xi32>
    %221 = vector.extract_strided_slice %3 {offsets = [0, 7], sizes = [16, 1], strides = [1, 1]} : vector<16x11xf32> to vector<16x1xf32>
    %cst_38 = arith.constant 0.000000e+00 : f32
    %222 = vector.shape_cast %220 : vector<1x512xi1> to vector<1x512xi1>
    %223 = vector.broadcast %222 : vector<1x512xi1> to vector<16x512xi1>
    %224 = vector.broadcast %cst_38 : f32 to vector<16x512xf32>
    %225 = arith.select %223, %218, %224 : vector<16x512xi1>, vector<16x512xf32>
    %226 = vector.broadcast %221 : vector<16x1xf32> to vector<16x512xf32>
    %227 = arith.mulf %226, %225 : vector<16x512xf32>
    %228 = arith.addf %217, %227 : vector<16x512xf32>
    %c509_i32 = arith.constant 509 : i32
    %229 = tpu.dynamic_rotate %145 by %c509_i32 dim 1 : vector<16x512xf32>, i32 -> vector<16x512xf32>
    %c13_i32_39 = arith.constant 13 : i32
    %230 = vector.broadcast %c13_i32_39 : i32 to vector<1x512xi32>
    %231 = arith.cmpi slt, %18, %230 : vector<1x512xi32>
    %232 = vector.extract_strided_slice %3 {offsets = [0, 8], sizes = [16, 1], strides = [1, 1]} : vector<16x11xf32> to vector<16x1xf32>
    %cst_40 = arith.constant 0.000000e+00 : f32
    %233 = vector.shape_cast %231 : vector<1x512xi1> to vector<1x512xi1>
    %234 = vector.broadcast %233 : vector<1x512xi1> to vector<16x512xi1>
    %235 = vector.broadcast %cst_40 : f32 to vector<16x512xf32>
    %236 = arith.select %234, %229, %235 : vector<16x512xi1>, vector<16x512xf32>
    %237 = vector.broadcast %232 : vector<16x1xf32> to vector<16x512xf32>
    %238 = arith.mulf %237, %236 : vector<16x512xf32>
    %239 = arith.addf %228, %238 : vector<16x512xf32>
    %c508_i32 = arith.constant 508 : i32
    %240 = tpu.dynamic_rotate %145 by %c508_i32 dim 1 : vector<16x512xf32>, i32 -> vector<16x512xf32>
    %c12_i32_41 = arith.constant 12 : i32
    %241 = vector.broadcast %c12_i32_41 : i32 to vector<1x512xi32>
    %242 = arith.cmpi slt, %18, %241 : vector<1x512xi32>
    %243 = vector.extract_strided_slice %3 {offsets = [0, 9], sizes = [16, 1], strides = [1, 1]} : vector<16x11xf32> to vector<16x1xf32>
    %cst_42 = arith.constant 0.000000e+00 : f32
    %244 = vector.shape_cast %242 : vector<1x512xi1> to vector<1x512xi1>
    %245 = vector.broadcast %244 : vector<1x512xi1> to vector<16x512xi1>
    %246 = vector.broadcast %cst_42 : f32 to vector<16x512xf32>
    %247 = arith.select %245, %240, %246 : vector<16x512xi1>, vector<16x512xf32>
    %248 = vector.broadcast %243 : vector<16x1xf32> to vector<16x512xf32>
    %249 = arith.mulf %248, %247 : vector<16x512xf32>
    %250 = arith.addf %239, %249 : vector<16x512xf32>
    %c507_i32 = arith.constant 507 : i32
    %251 = tpu.dynamic_rotate %145 by %c507_i32 dim 1 : vector<16x512xf32>, i32 -> vector<16x512xf32>
    %c11_i32_43 = arith.constant 11 : i32
    %252 = vector.broadcast %c11_i32_43 : i32 to vector<1x512xi32>
    %253 = arith.cmpi slt, %18, %252 : vector<1x512xi32>
    %254 = vector.extract_strided_slice %3 {offsets = [0, 10], sizes = [16, 1], strides = [1, 1]} : vector<16x11xf32> to vector<16x1xf32>
    %cst_44 = arith.constant 0.000000e+00 : f32
    %255 = vector.shape_cast %253 : vector<1x512xi1> to vector<1x512xi1>
    %256 = vector.broadcast %255 : vector<1x512xi1> to vector<16x512xi1>
    %257 = vector.broadcast %cst_44 : f32 to vector<16x512xf32>
    %258 = arith.select %256, %251, %257 : vector<16x512xi1>, vector<16x512xf32>
    %259 = vector.broadcast %254 : vector<16x1xf32> to vector<16x512xf32>
    %260 = arith.mulf %259, %258 : vector<16x512xf32>
    %261 = arith.addf %250, %260 : vector<16x512xf32>
    %cst_45 = arith.constant 0.000000e+00 : f32
    %262 = vector.broadcast %cst_45 : f32 to vector<16x512xf32>
    %263 = arith.maximumf %261, %262 : vector<16x512xf32>
    %cst_46 = arith.constant dense<0.000000e+00> : vector<16x512xf32>
    %264 = tpu.matmul %4, %263, %cst_46 {dimension_numbers = #tpu.dot_dimension_numbers<[1], [0], [0], [1], [0, 0, 1, 1], [], []>} : vector<16x16xf32>, vector<16x512xf32>, vector<16x512xf32> -> vector<16x512xf32>
    %265 = vector.broadcast %9 : vector<16x1xf32> to vector<16x512xf32>
    %266 = arith.addf %264, %265 : vector<16x512xf32>
    %cst_47 = arith.constant 0.000000e+00 : f32
    %267 = vector.broadcast %cst_47 : f32 to vector<16x512xf32>
    %268 = arith.maximumf %266, %267 : vector<16x512xf32>
    %cst_48 = arith.constant dense<0.000000e+00> : vector<16x512xf32>
    %269 = tpu.matmul %5, %268, %cst_48 {dimension_numbers = #tpu.dot_dimension_numbers<[1], [0], [0], [1], [0, 0, 1, 1], [], []>} : vector<16x16xf32>, vector<16x512xf32>, vector<16x512xf32> -> vector<16x512xf32>
    %270 = vector.broadcast %10 : vector<16x1xf32> to vector<16x512xf32>
    %271 = arith.addf %269, %270 : vector<16x512xf32>
    %272 = vector.extract_strided_slice %271 {offsets = [0, 0], sizes = [16, 256], strides = [1, 1]} : vector<16x512xf32> to vector<16x256xf32>
    %c0_49 = arith.constant 0 : index
    %c0_50 = arith.constant 0 : index
    %c0_51 = arith.constant 0 : index
    %273 = vector.load %arg2[%c0_49, %c0_50, %c0_51] : memref<2x16x256xf32, #tpu.memory_space<vmem>>, vector<1x16x256xf32>
    %274 = vector.shape_cast %273 : vector<1x16x256xf32> to vector<16x256xf32>
    %275 = vector.shape_cast %272 : vector<16x256xf32> to vector<1x16x256xf32>
    tpu.vector_store %arg2[%c0_49, %c0_50, %c0_51], %275 {strides = array<i32>} : memref<2x16x256xf32, #tpu.memory_space<vmem>>, vector<1x16x256xf32>,
    %276 = vector.extract_strided_slice %271 {offsets = [0, 256], sizes = [16, 256], strides = [1, 1]} : vector<16x512xf32> to vector<16x256xf32>
    %c1_52 = arith.constant 1 : index
    %c0_53 = arith.constant 0 : index
    %c0_54 = arith.constant 0 : index
    %277 = vector.load %arg2[%c1_52, %c0_53, %c0_54] : memref<2x16x256xf32, #tpu.memory_space<vmem>>, vector<1x16x256xf32>
    %278 = vector.shape_cast %277 : vector<1x16x256xf32> to vector<16x256xf32>
    %279 = vector.shape_cast %276 : vector<16x256xf32> to vector<1x16x256xf32>
    tpu.vector_store %arg2[%c1_52, %c0_53, %c0_54], %279 {strides = array<i32>} : memref<2x16x256xf32, #tpu.memory_space<vmem>>, vector<1x16x256xf32>,
    return
  }
}

</mosaic_0001>

<llo_original>
// kernel: ms_threeway_dw_bottleneck.1
$region0: #{ms_threeway_dw_bottleneck.1}
  #allocation0 [shape = 'u32[]', space=smem, size = 0x4, offset = 0x4, fixed_abs, tag = 'smem constant byte address 0x4 - core index']
  #allocation1 [shape = 'u32[72,128]{1,0:T(1,128)}', space=vmem, size = 0x9000, scoped, tag = 'internal scratch']
  %s0 = inlined_call_operand.vmem [shape: f32[2,8,256], index: 0, kind: input, shape index: {}]
  %s1 = inlined_call_operand.vmem [shape: f32[16,128], index: 1, kind: input, shape index: {}]
  %s2 = inlined_call_operand.vmem [shape: f32[2,16,256], index: 2, kind: output, shape index: {}]
  %s3 = sld [smem:[#allocation0]]
  $region18: #{ms_threeway_dw_bottleneck.1} parent=0
    _
  %s5 = ssub.s32 1, %s3
  %s6 = scalar_select 0, %s5, %s3
  // Predicated region
  $region2: #{ms_threeway_dw_bottleneck.1} parent=0 // pred_check
    _
  $region3: #{ms_threeway_dw_bottleneck.1} parent=0 // pred_check_branch
    %8 = sbr.rel (0) target = $region5
  $region4: #{ms_threeway_dw_bottleneck.1} parent=0 // pred_region
    _
  $region5: #{ms_threeway_dw_bottleneck.1} parent=0 // pred_fallthru
    _
  // Predicated region
  $region6: #{ms_threeway_dw_bottleneck.1} parent=0 // pred_check
    _
  $region7: #{ms_threeway_dw_bottleneck.1} parent=0 // pred_check_branch
    %10 = sbr.rel (0) target = $region9
  $region8: #{ms_threeway_dw_bottleneck.1} parent=0 // pred_region
    _
  $region9: #{ms_threeway_dw_bottleneck.1} parent=0 // pred_fallthru
    _
  %v11 = vld [vmem:[%s1] sm:$0xff]
  %v12 = vld [vmem:[%s1 + $0x8] sm:$0xff]
  %v13 = vld [vmem:[%s0] sm:$0xff]
  %v14 = vld [vmem:[%s0 + $0x8] sm:$0xff]
  %s15 = scalar_lea.vmem %s0, 16
  %v16 = vld [vmem:[%s15] sm:$0xff]
  %v17 = vld [vmem:[%s15 + $0x8] sm:$0xff]
  %v18 = vlaneseq
  %v19 = vand.u32 %v18, 127
  %v20 = vadd.s32 %v19, 128
  %v21 = vadd.s32 %v19, 256
  %v22 = vadd.s32 %v19, 384
  %v23 = vand.u32 %v19, 15
  %v24 = vand.u32 %v20, 15
  %v25 = vand.u32 %v21, 15
  %v26 = vand.u32 %v22, 15
  %v27 = vand.u32 %v19, 255
  %v28 = vand.u32 %v20, 255
  %v29 = vand.u32 %v21, 255
  %v30 = vand.u32 %v22, 255
  %v31 = vshra.s32 %v27, 4
  %v32 = vshra.s32 %v28, 4
  %v33 = vshra.s32 %v29, 4
  %v34 = vshra.s32 %v30, 4
  %36 = vset.pattern.permute.xlu0 62
  %37 = vperm.xlu0 %36, %v11
  %v38 = vpop.permute.xlu0 %37
  %41 = vset.pattern.permute.xlu0 62
  %42 = vperm.xlu0 %41, %v12
  %v43 = vpop.permute.xlu0 %42
  %vm45 = vcmask 64512
  %v46 = vsel %vm45, %v11, 0
  %v48 = vsel %vm45, %v12, 0
  %50 = vmatpush.msra.mxu0 0.0
  %51 = vmatpush.msra.mxu0 0.0
  %52 = vmatpush.msra.mxu0 0.0
  %53 = vmatpush.msra.mxu0 0.0
  %54 = vmatpush.msra.mxu0 0.0
  %55 = vmatpush.msra.mxu0 0.0
  %56 = vmatpush.msra.mxu0 0.0
  %57 = vmatpush.msra.mxu0 0.0
  %58 = vmatpush.msra.mxu0 0.0
  %59 = vmatpush.msra.mxu0 0.0
  %60 = vmatpush.msra.mxu0 0.0
  %61 = vmatpush.msra.mxu0 0.0
  %62 = vmatpush.msra.mxu0 0.0
  %63 = vmatpush.msra.mxu0 0.0
  %64 = vmatpush.msra.mxu0 0.0
  %65 = vmatpush.msra.mxu0 %v13
  %66 = vmatmul.f32.gmra.mxu0 %v46
  %v67 = vpop.f32.mrf.mxu0
  %v68 = vadd.f32 %v38, %v67
  %69 = vmatmul.f32.gmra.mxu0 %v48
  %v70 = vpop.f32.mrf.mxu0
  %v71 = vadd.f32 %v43, %v70
  %72 = vdwg.mxu0
  %73 = vmatpush.msra.mxu0 0.0
  %74 = vmatpush.msra.mxu0 0.0
  %75 = vmatpush.msra.mxu0 0.0
  %76 = vmatpush.msra.mxu0 0.0
  %77 = vmatpush.msra.mxu0 0.0
  %78 = vmatpush.msra.mxu0 0.0
  %79 = vmatpush.msra.mxu0 0.0
  %80 = vmatpush.msra.mxu0 0.0
  %81 = vmatpush.msra.mxu0 0.0
  %82 = vmatpush.msra.mxu0 0.0
  %83 = vmatpush.msra.mxu0 0.0
  %84 = vmatpush.msra.mxu0 0.0
  %85 = vmatpush.msra.mxu0 0.0
  %86 = vmatpush.msra.mxu0 0.0
  %87 = vmatpush.msra.mxu0 0.0
  %88 = vmatpush.msra.mxu0 %v14
  %89 = vmatmul.f32.gmra.mxu0 %v46
  %v90 = vpop.f32.mrf.mxu0
  %v91 = vadd.f32 %v38, %v90
  %92 = vmatmul.f32.gmra.mxu0 %v48
  %v93 = vpop.f32.mrf.mxu0
  %v94 = vadd.f32 %v43, %v93
  %95 = vdwg.mxu0
  %96 = vmatpush.msra.mxu0 0.0
  %97 = vmatpush.msra.mxu0 0.0
  %98 = vmatpush.msra.mxu0 0.0
  %99 = vmatpush.msra.mxu0 0.0
  %100 = vmatpush.msra.mxu0 0.0
  %101 = vmatpush.msra.mxu0 0.0
  %102 = vmatpush.msra.mxu0 0.0
  %103 = vmatpush.msra.mxu0 0.0
  %104 = vmatpush.msra.mxu0 0.0
  %105 = vmatpush.msra.mxu0 0.0
  %106 = vmatpush.msra.mxu0 0.0
  %107 = vmatpush.msra.mxu0 0.0
  %108 = vmatpush.msra.mxu0 0.0
  %109 = vmatpush.msra.mxu0 0.0
  %110 = vmatpush.msra.mxu0 0.0
  %111 = vmatpush.msra.mxu0 %v16
  %112 = vmatmul.f32.gmra.mxu0 %v46
  %v113 = vpop.f32.mrf.mxu0
  %v114 = vadd.f32 %v38, %v113
  %115 = vmatmul.f32.gmra.mxu0 %v48
  %v116 = vpop.f32.mrf.mxu0
  %v117 = vadd.f32 %v43, %v116
  %118 = vdwg.mxu0
  %119 = vmatpush.msra.mxu0 0.0
  %120 = vmatpush.msra.mxu0 0.0
  %121 = vmatpush.msra.mxu0 0.0
  %122 = vmatpush.msra.mxu0 0.0
  %123 = vmatpush.msra.mxu0 0.0
  %124 = vmatpush.msra.mxu0 0.0
  %125 = vmatpush.msra.mxu0 0.0
  %126 = vmatpush.msra.mxu0 0.0
  %127 = vmatpush.msra.mxu0 0.0
  %128 = vmatpush.msra.mxu0 0.0
  %129 = vmatpush.msra.mxu0 0.0
  %130 = vmatpush.msra.mxu0 0.0
  %131 = vmatpush.msra.mxu0 0.0
  %132 = vmatpush.msra.mxu0 0.0
  %133 = vmatpush.msra.mxu0 0.0
  %134 = vmatpush.msra.mxu0 %v17
  %135 = vmatmul.f32.gmra.mxu0 %v46
  %v136 = vpop.f32.mrf.mxu0
  %v137 = vadd.f32 %v38, %v136
  %138 = vmatmul.f32.gmra.mxu0 %v48
  %v139 = vpop.f32.mrf.mxu0
  %v140 = vadd.f32 %v43, %v139
  %141 = vdwg.mxu0
  %v142 = vmax.f32 %v68, 0.0
  %v143 = vmax.f32 %v91, 0.0
  %v144 = vmax.f32 %v114, 0.0
  %v145 = vmax.f32 %v137, 0.0
  %v146 = vmax.f32 %v71, 0.0
  %v147 = vmax.f32 %v94, 0.0
  %v148 = vmax.f32 %v117, 0.0
  %v149 = vmax.f32 %v140, 0.0
  %150 = vset.pattern.permute.xlu0 63
  %151 = vperm.xlu0 %150, %v11
  %v152 = vpop.permute.xlu0 %151
  %154 = vset.pattern.permute.xlu0 63
  %155 = vperm.xlu0 %154, %v12
  %v156 = vpop.permute.xlu0 %155
  %v158 = vadd.f32 %v142, %v152
  %v159 = vadd.f32 %v143, %v152
  %v160 = vadd.f32 %v144, %v152
  %v161 = vadd.f32 %v145, %v152
  %v162 = vadd.f32 %v146, %v156
  %v163 = vadd.f32 %v147, %v156
  %v164 = vadd.f32 %v148, %v156
  %v165 = vadd.f32 %v149, %v156
  %166 = vrot.lane.b32.xlu0 %v142, 80
  %v167 = vpop.permute.xlu0 %166
  %168 = vrot.lane.b32.xlu0 %v146, 80
  %v169 = vpop.permute.xlu0 %168
  %170 = vrot.lane.b32.xlu0 %v143, 80
  %v171 = vpop.permute.xlu0 %170
  %172 = vrot.lane.b32.xlu0 %v147, 80
  %v173 = vpop.permute.xlu0 %172
  %174 = vrot.lane.b32.xlu0 %v144, 80
  %v175 = vpop.permute.xlu0 %174
  %176 = vrot.lane.b32.xlu0 %v148, 80
  %v177 = vpop.permute.xlu0 %176
  %178 = vrot.lane.b32.xlu0 %v145, 80
  %v179 = vpop.permute.xlu0 %178
  %180 = vrot.lane.b32.xlu0 %v149, 80
  %v181 = vpop.permute.xlu0 %180
  %vm182 = vcmp.lt.s32.totalorder %v19, 80
  %v183 = vsel %vm182, %v175, %v179
  %v184 = vsel %vm182, %v177, %v181
  %v185 = vsel %vm182, %v171, %v175
  %v186 = vsel %vm182, %v173, %v177
  %v187 = vsel %vm182, %v167, %v171
  %v188 = vsel %vm182, %v169, %v173
  %v189 = vsel %vm182, %v179, %v167
  %v190 = vsel %vm182, %v181, %v169
  %vm191 = vcmp.ge.s32.totalorder %v31, 5
  %vm192 = vcmp.ge.s32.totalorder %v32, 5
  %vm193 = vcmp.ge.s32.totalorder %v33, 5
  %vm194 = vcmp.ge.s32.totalorder %v34, 5
  %v195 = vsel %vm191, 1, 0
  %v196 = vsel %vm192, 1, 0
  %v197 = vsel %vm193, 1, 0
  %v198 = vsel %vm194, 1, 0
  %vm199 = vcmp.eq.s32.totalorder %v195, 1
  %vm200 = vcmp.eq.s32.totalorder %v196, 1
  %vm201 = vcmp.eq.s32.totalorder %v197, 1
  %vm202 = vcmp.eq.s32.totalorder %v198, 1
  %v203 = vsel %vm199, %v189, 0.0
  %v204 = vsel %vm200, %v187, 0.0
  %v205 = vsel %vm201, %v185, 0.0
  %v206 = vsel %vm202, %v183, 0.0
  %v207 = vsel %vm199, %v190, 0.0
  %v208 = vsel %vm200, %v188, 0.0
  %v209 = vsel %vm201, %v186, 0.0
  %v210 = vsel %vm202, %v184, 0.0
  %211 = vset.pattern.permute.xlu0 8
  %212 = vperm.xlu0 %211, %v11
  %v213 = vpop.permute.xlu0 %212
  %215 = vset.pattern.permute.xlu0 8
  %216 = vperm.xlu0 %215, %v12
  %v217 = vpop.permute.xlu0 %216
  %v219 = vmul.f32 %v213, %v203
  %v220 = vmul.f32 %v213, %v204
  %v221 = vmul.f32 %v213, %v205
  %v222 = vmul.f32 %v213, %v206
  %v223 = vmul.f32 %v217, %v207
  %v224 = vmul.f32 %v217, %v208
  %v225 = vmul.f32 %v217, %v209
  %v226 = vmul.f32 %v217, %v210
  %v227 = vadd.f32 %v158, %v219
  %v228 = vadd.f32 %v159, %v220
  %v229 = vadd.f32 %v160, %v221
  %v230 = vadd.f32 %v161, %v222
  %v231 = vadd.f32 %v162, %v223
  %v232 = vadd.f32 %v163, %v224
  %v233 = vadd.f32 %v164, %v225
  %v234 = vadd.f32 %v165, %v226
  %235 = vrot.lane.b32.xlu0 %v142, 64
  %v236 = vpop.permute.xlu0 %235
  %237 = vrot.lane.b32.xlu0 %v146, 64
  %v238 = vpop.permute.xlu0 %237
  %239 = vrot.lane.b32.xlu0 %v143, 64
  %v240 = vpop.permute.xlu0 %239
  %241 = vrot.lane.b32.xlu0 %v147, 64
  %v242 = vpop.permute.xlu0 %241
  %243 = vrot.lane.b32.xlu0 %v144, 64
  %v244 = vpop.permute.xlu0 %243
  %245 = vrot.lane.b32.xlu0 %v148, 64
  %v246 = vpop.permute.xlu0 %245
  %247 = vrot.lane.b32.xlu0 %v145, 64
  %v248 = vpop.permute.xlu0 %247
  %249 = vrot.lane.b32.xlu0 %v149, 64
  %v250 = vpop.permute.xlu0 %249
  %vm251 = vcmp.lt.s32.totalorder %v19, 64
  %v252 = vsel %vm251, %v244, %v248
  %v253 = vsel %vm251, %v246, %v250
  %v254 = vsel %vm251, %v240, %v244
  %v255 = vsel %vm251, %v242, %v246
  %v256 = vsel %vm251, %v236, %v240
  %v257 = vsel %vm251, %v238, %v242
  %v258 = vsel %vm251, %v248, %v236
  %v259 = vsel %vm251, %v250, %v238
  %vm260 = vcmp.ge.s32.totalorder %v31, 4
  %vm261 = vcmp.ge.s32.totalorder %v32, 4
  %vm262 = vcmp.ge.s32.totalorder %v33, 4
  %vm263 = vcmp.ge.s32.totalorder %v34, 4
  %v264 = vsel %vm260, 1, 0
  %v265 = vsel %vm261, 1, 0
  %v266 = vsel %vm262, 1, 0
  %v267 = vsel %vm263, 1, 0
  %vm268 = vcmp.eq.s32.totalorder %v264, 1
  %vm269 = vcmp.eq.s32.totalorder %v265, 1
  %vm270 = vcmp.eq.s32.totalorder %v266, 1
  %vm271 = vcmp.eq.s32.totalorder %v267, 1
  %v272 = vsel %vm268, %v258, 0.0
  %v273 = vsel %vm269, %v256, 0.0
  %v274 = vsel %vm270, %v254, 0.0
  %v275 = vsel %vm271, %v252, 0.0
  %v276 = vsel %vm268, %v259, 0.0
  %v277 = vsel %vm269, %v257, 0.0
  %v278 = vsel %vm270, %v255, 0.0
  %v279 = vsel %vm271, %v253, 0.0
  %280 = vset.pattern.permute.xlu0 9
  %281 = vperm.xlu0 %280, %v11
  %v282 = vpop.permute.xlu0 %281
  %284 = vset.pattern.permute.xlu0 9
  %285 = vperm.xlu0 %284, %v12
  %v286 = vpop.permute.xlu0 %285
  %v288 = vmul.f32 %v282, %v272
  %v289 = vmul.f32 %v282, %v273
  %v290 = vmul.f32 %v282, %v274
  %v291 = vmul.f32 %v282, %v275
  %v292 = vmul.f32 %v286, %v276
  %v293 = vmul.f32 %v286, %v277
  %v294 = vmul.f32 %v286, %v278
  %v295 = vmul.f32 %v286, %v279
  %v296 = vadd.f32 %v227, %v288
  %v297 = vadd.f32 %v228, %v289
  %v298 = vadd.f32 %v229, %v290
  %v299 = vadd.f32 %v230, %v291
  %v300 = vadd.f32 %v231, %v292
  %v301 = vadd.f32 %v232, %v293
  %v302 = vadd.f32 %v233, %v294
  %v303 = vadd.f32 %v234, %v295
  %304 = vrot.lane.b32.xlu0 %v142, 48
  %v305 = vpop.permute.xlu0 %304
  %306 = vrot.lane.b32.xlu0 %v146, 48
  %v307 = vpop.permute.xlu0 %306
  %308 = vrot.lane.b32.xlu0 %v143, 48
  %v309 = vpop.permute.xlu0 %308
  %310 = vrot.lane.b32.xlu0 %v147, 48
  %v311 = vpop.permute.xlu0 %310
  %312 = vrot.lane.b32.xlu0 %v144, 48
  %v313 = vpop.permute.xlu0 %312
  %314 = vrot.lane.b32.xlu0 %v148, 48
  %v315 = vpop.permute.xlu0 %314
  %316 = vrot.lane.b32.xlu0 %v145, 48
  %v317 = vpop.permute.xlu0 %316
  %318 = vrot.lane.b32.xlu0 %v149, 48
  %v319 = vpop.permute.xlu0 %318
  %vm320 = vcmp.lt.s32.totalorder %v19, 48
  %v321 = vsel %vm320, %v313, %v317
  %v322 = vsel %vm320, %v315, %v319
  %v323 = vsel %vm320, %v309, %v313
  %v324 = vsel %vm320, %v311, %v315
  %v325 = vsel %vm320, %v305, %v309
  %v326 = vsel %vm320, %v307, %v311
  %v327 = vsel %vm320, %v317, %v305
  %v328 = vsel %vm320, %v319, %v307
  %vm329 = vcmp.ge.s32.totalorder %v31, 3
  %vm330 = vcmp.ge.s32.totalorder %v32, 3
  %vm331 = vcmp.ge.s32.totalorder %v33, 3
  %vm332 = vcmp.ge.s32.totalorder %v34, 3
  %v333 = vsel %vm329, 1, 0
  %v334 = vsel %vm330, 1, 0
  %v335 = vsel %vm331, 1, 0
  %v336 = vsel %vm332, 1, 0
  %vm337 = vcmp.eq.s32.totalorder %v333, 1
  %vm338 = vcmp.eq.s32.totalorder %v334, 1
  %vm339 = vcmp.eq.s32.totalorder %v335, 1
  %vm340 = vcmp.eq.s32.totalorder %v336, 1
  %v341 = vsel %vm337, %v327, 0.0
  %v342 = vsel %vm338, %v325, 0.0
  %v343 = vsel %vm339, %v323, 0.0
  %v344 = vsel %vm340, %v321, 0.0
  %v345 = vsel %vm337, %v328, 0.0
  %v346 = vsel %vm338, %v326, 0.0
  %v347 = vsel %vm339, %v324, 0.0
  %v348 = vsel %vm340, %v322, 0.0
  %349 = vset.pattern.permute.xlu0 10
  %350 = vperm.xlu0 %349, %v11
  %v351 = vpop.permute.xlu0 %350
  %353 = vset.pattern.permute.xlu0 10
  %354 = vperm.xlu0 %353, %v12
  %v355 = vpop.permute.xlu0 %354
  %v357 = vmul.f32 %v351, %v341
  %v358 = vmul.f32 %v351, %v342
  %v359 = vmul.f32 %v351, %v343
  %v360 = vmul.f32 %v351, %v344
  %v361 = vmul.f32 %v355, %v345
  %v362 = vmul.f32 %v355, %v346
  %v363 = vmul.f32 %v355, %v347
  %v364 = vmul.f32 %v355, %v348
  %v365 = vadd.f32 %v296, %v357
  %v366 = vadd.f32 %v297, %v358
  %v367 = vadd.f32 %v298, %v359
  %v368 = vadd.f32 %v299, %v360
  %v369 = vadd.f32 %v300, %v361
  %v370 = vadd.f32 %v301, %v362
  %v371 = vadd.f32 %v302, %v363
  %v372 = vadd.f32 %v303, %v364
  %373 = vrot.lane.b32.xlu0 %v142, 32
  %v374 = vpop.permute.xlu0 %373
  %375 = vrot.lane.b32.xlu0 %v146, 32
  %v376 = vpop.permute.xlu0 %375
  %377 = vrot.lane.b32.xlu0 %v143, 32
  %v378 = vpop.permute.xlu0 %377
  %379 = vrot.lane.b32.xlu0 %v147, 32
  %v380 = vpop.permute.xlu0 %379
  %381 = vrot.lane.b32.xlu0 %v144, 32
  %v382 = vpop.permute.xlu0 %381
  %383 = vrot.lane.b32.xlu0 %v148, 32
  %v384 = vpop.permute.xlu0 %383
  %385 = vrot.lane.b32.xlu0 %v145, 32
  %v386 = vpop.permute.xlu0 %385
  %387 = vrot.lane.b32.xlu0 %v149, 32
  %v388 = vpop.permute.xlu0 %387
  %vm389 = vcmp.lt.s32.totalorder %v19, 32
  %v390 = vsel %vm389, %v382, %v386
  %v391 = vsel %vm389, %v384, %v388
  %v392 = vsel %vm389, %v378, %v382
  %v393 = vsel %vm389, %v380, %v384
  %v394 = vsel %vm389, %v374, %v378
  %v395 = vsel %vm389, %v376, %v380
  %v396 = vsel %vm389, %v386, %v374
  %v397 = vsel %vm389, %v388, %v376
  %vm398 = vcmp.ge.s32.totalorder %v31, 2
  %vm399 = vcmp.ge.s32.totalorder %v32, 2
  %vm400 = vcmp.ge.s32.totalorder %v33, 2
  %vm401 = vcmp.ge.s32.totalorder %v34, 2
  %v402 = vsel %vm398, 1, 0
  %v403 = vsel %vm399, 1, 0
  %v404 = vsel %vm400, 1, 0
  %v405 = vsel %vm401, 1, 0
  %vm406 = vcmp.eq.s32.totalorder %v402, 1
  %vm407 = vcmp.eq.s32.totalorder %v403, 1
  %vm408 = vcmp.eq.s32.totalorder %v404, 1
  %vm409 = vcmp.eq.s32.totalorder %v405, 1
  %v410 = vsel %vm406, %v396, 0.0
  %v411 = vsel %vm407, %v394, 0.0
  %v412 = vsel %vm408, %v392, 0.0
  %v413 = vsel %vm409, %v390, 0.0
  %v414 = vsel %vm406, %v397, 0.0
  %v415 = vsel %vm407, %v395, 0.0
  %v416 = vsel %vm408, %v393, 0.0
  %v417 = vsel %vm409, %v391, 0.0
  %418 = vset.pattern.permute.xlu0 11
  %419 = vperm.xlu0 %418, %v11
  %v420 = vpop.permute.xlu0 %419
  %422 = vset.pattern.permute.xlu0 11
  %423 = vperm.xlu0 %422, %v12
  %v424 = vpop.permute.xlu0 %423
  %v426 = vmul.f32 %v420, %v410
  %v427 = vmul.f32 %v420, %v411
  %v428 = vmul.f32 %v420, %v412
  %v429 = vmul.f32 %v420, %v413
  %v430 = vmul.f32 %v424, %v414
  %v431 = vmul.f32 %v424, %v415
  %v432 = vmul.f32 %v424, %v416
  %v433 = vmul.f32 %v424, %v417
  %v434 = vadd.f32 %v365, %v426
  %v435 = vadd.f32 %v366, %v427
  %v436 = vadd.f32 %v367, %v428
  %v437 = vadd.f32 %v368, %v429
  %v438 = vadd.f32 %v369, %v430
  %v439 = vadd.f32 %v370, %v431
  %v440 = vadd.f32 %v371, %v432
  %v441 = vadd.f32 %v372, %v433
  %442 = vrot.lane.b32.xlu0 %v142, 16
  %v443 = vpop.permute.xlu0 %442
  %444 = vrot.lane.b32.xlu0 %v146, 16
  %v445 = vpop.permute.xlu0 %444
  %446 = vrot.lane.b32.xlu0 %v143, 16
  %v447 = vpop.permute.xlu0 %446
  %448 = vrot.lane.b32.xlu0 %v147, 16
  %v449 = vpop.permute.xlu0 %448
  %450 = vrot.lane.b32.xlu0 %v144, 16
  %v451 = vpop.permute.xlu0 %450
  %452 = vrot.lane.b32.xlu0 %v148, 16
  %v453 = vpop.permute.xlu0 %452
  %454 = vrot.lane.b32.xlu0 %v145, 16
  %v455 = vpop.permute.xlu0 %454
  %456 = vrot.lane.b32.xlu0 %v149, 16
  %v457 = vpop.permute.xlu0 %456
  %vm458 = vcmp.lt.s32.totalorder %v19, 16
  %v459 = vsel %vm458, %v451, %v455
  %v460 = vsel %vm458, %v453, %v457
  %v461 = vsel %vm458, %v447, %v451
  %v462 = vsel %vm458, %v449, %v453
  %v463 = vsel %vm458, %v443, %v447
  %v464 = vsel %vm458, %v445, %v449
  %v465 = vsel %vm458, %v455, %v443
  %v466 = vsel %vm458, %v457, %v445
  %vm467 = vcmp.ge.s32.totalorder %v31, 1
  %vm468 = vcmp.ge.s32.totalorder %v32, 1
  %vm469 = vcmp.ge.s32.totalorder %v33, 1
  %vm470 = vcmp.ge.s32.totalorder %v34, 1
  %v471 = vsel %vm467, 1, 0
  %v472 = vsel %vm468, 1, 0
  %v473 = vsel %vm469, 1, 0
  %v474 = vsel %vm470, 1, 0
  %vm475 = vcmp.eq.s32.totalorder %v471, 1
  %vm476 = vcmp.eq.s32.totalorder %v472, 1
  %vm477 = vcmp.eq.s32.totalorder %v473, 1
  %vm478 = vcmp.eq.s32.totalorder %v474, 1
  %v479 = vsel %vm475, %v465, 0.0
  %v480 = vsel %vm476, %v463, 0.0
  %v481 = vsel %vm477, %v461, 0.0
  %v482 = vsel %vm478, %v459, 0.0
  %v483 = vsel %vm475, %v466, 0.0
  %v484 = vsel %vm476, %v464, 0.0
  %v485 = vsel %vm477, %v462, 0.0
  %v486 = vsel %vm478, %v460, 0.0
  %487 = vset.pattern.permute.xlu0 12
  %488 = vperm.xlu0 %487, %v11
  %v489 = vpop.permute.xlu0 %488
  %491 = vset.pattern.permute.xlu0 12
  %492 = vperm.xlu0 %491, %v12
  %v493 = vpop.permute.xlu0 %492
  %v495 = vmul.f32 %v489, %v479
  %v496 = vmul.f32 %v489, %v480
  %v497 = vmul.f32 %v489, %v481
  %v498 = vmul.f32 %v489, %v482
  %v499 = vmul.f32 %v493, %v483
  %v500 = vmul.f32 %v493, %v484
  %v501 = vmul.f32 %v493, %v485
  %v502 = vmul.f32 %v493, %v486
  %v503 = vadd.f32 %v434, %v495
  %v504 = vadd.f32 %v435, %v496
  %v505 = vadd.f32 %v436, %v497
  %v506 = vadd.f32 %v437, %v498
  %v507 = vadd.f32 %v438, %v499
  %v508 = vadd.f32 %v439, %v500
  %v509 = vadd.f32 %v440, %v501
  %v510 = vadd.f32 %v441, %v502
  %511 = vset.pattern.permute.xlu0 13
  %512 = vperm.xlu0 %511, %v11
  %v513 = vpop.permute.xlu0 %512
  %515 = vset.pattern.permute.xlu0 13
  %516 = vperm.xlu0 %515, %v12
  %v517 = vpop.permute.xlu0 %516
  %v519 = vmul.f32 %v513, %v142
  %v520 = vmul.f32 %v513, %v143
  %v521 = vmul.f32 %v513, %v144
  %v522 = vmul.f32 %v513, %v145
  %v523 = vmul.f32 %v517, %v146
  %v524 = vmul.f32 %v517, %v147
  %v525 = vmul.f32 %v517, %v148
  %v526 = vmul.f32 %v517, %v149
  %v527 = vadd.f32 %v503, %v519
  %v528 = vadd.f32 %v504, %v520
  %v529 = vadd.f32 %v505, %v521
  %v530 = vadd.f32 %v506, %v522
  %v531 = vadd.f32 %v507, %v523
  %v532 = vadd.f32 %v508, %v524
  %v533 = vadd.f32 %v509, %v525
  %v534 = vadd.f32 %v510, %v526
  %535 = vrot.lane.b32.xlu0 %v142, 112
  %v536 = vpop.permute.xlu0 %535
  %537 = vrot.lane.b32.xlu0 %v146, 112
  %v538 = vpop.permute.xlu0 %537
  %539 = vrot.lane.b32.xlu0 %v143, 112
  %v540 = vpop.permute.xlu0 %539
  %541 = vrot.lane.b32.xlu0 %v147, 112
  %v542 = vpop.permute.xlu0 %541
  %543 = vrot.lane.b32.xlu0 %v144, 112
  %v544 = vpop.permute.xlu0 %543
  %545 = vrot.lane.b32.xlu0 %v148, 112
  %v546 = vpop.permute.xlu0 %545
  %547 = vrot.lane.b32.xlu0 %v145, 112
  %v548 = vpop.permute.xlu0 %547
  %549 = vrot.lane.b32.xlu0 %v149, 112
  %v550 = vpop.permute.xlu0 %549
  %vm551 = vcmp.lt.s32.totalorder %v19, 112
  %v552 = vsel %vm551, %v544, %v548
  %v553 = vsel %vm551, %v546, %v550
  %v554 = vsel %vm551, %v540, %v544
  %v555 = vsel %vm551, %v542, %v546
  %v556 = vsel %vm551, %v536, %v540
  %v557 = vsel %vm551, %v538, %v542
  %v558 = vsel %vm551, %v548, %v536
  %v559 = vsel %vm551, %v550, %v538
  %vm560 = vcmp.lt.s32.totalorder %v31, 15
  %vm561 = vcmp.lt.s32.totalorder %v32, 15
  %vm562 = vcmp.lt.s32.totalorder %v33, 15
  %vm563 = vcmp.lt.s32.totalorder %v34, 15
  %v564 = vsel %vm560, 1, 0
  %v565 = vsel %vm561, 1, 0
  %v566 = vsel %vm562, 1, 0
  %v567 = vsel %vm563, 1, 0
  %vm568 = vcmp.eq.s32.totalorder %v564, 1
  %vm569 = vcmp.eq.s32.totalorder %v565, 1
  %vm570 = vcmp.eq.s32.totalorder %v566, 1
  %vm571 = vcmp.eq.s32.totalorder %v567, 1
  %v572 = vsel %vm568, %v556, 0.0
  %v573 = vsel %vm569, %v554, 0.0
  %v574 = vsel %vm570, %v552, 0.0
  %v575 = vsel %vm571, %v558, 0.0
  %v576 = vsel %vm568, %v557, 0.0
  %v577 = vsel %vm569, %v555, 0.0
  %v578 = vsel %vm570, %v553, 0.0
  %v579 = vsel %vm571, %v559, 0.0
  %580 = vset.pattern.permute.xlu0 14
  %581 = vperm.xlu0 %580, %v11
  %v582 = vpop.permute.xlu0 %581
  %584 = vset.pattern.permute.xlu0 14
  %585 = vperm.xlu0 %584, %v12
  %v586 = vpop.permute.xlu0 %585
  %v588 = vmul.f32 %v582, %v572
  %v589 = vmul.f32 %v582, %v573
  %v590 = vmul.f32 %v582, %v574
  %v591 = vmul.f32 %v582, %v575
  %v592 = vmul.f32 %v586, %v576
  %v593 = vmul.f32 %v586, %v577
  %v594 = vmul.f32 %v586, %v578
  %v595 = vmul.f32 %v586, %v579
  %v596 = vadd.f32 %v527, %v588
  %v597 = vadd.f32 %v528, %v589
  %v598 = vadd.f32 %v529, %v590
  %v599 = vadd.f32 %v530, %v591
  %v600 = vadd.f32 %v531, %v592
  %v601 = vadd.f32 %v532, %v593
  %v602 = vadd.f32 %v533, %v594
  %v603 = vadd.f32 %v534, %v595
  %604 = vrot.lane.b32.xlu0 %v142, 96
  %v605 = vpop.permute.xlu0 %604
  %606 = vrot.lane.b32.xlu0 %v146, 96
  %v607 = vpop.permute.xlu0 %606
  %608 = vrot.lane.b32.xlu0 %v143, 96
  %v609 = vpop.permute.xlu0 %608
  %610 = vrot.lane.b32.xlu0 %v147, 96
  %v611 = vpop.permute.xlu0 %610
  %612 = vrot.lane.b32.xlu0 %v144, 96
  %v613 = vpop.permute.xlu0 %612
  %614 = vrot.lane.b32.xlu0 %v148, 96
  %v615 = vpop.permute.xlu0 %614
  %616 = vrot.lane.b32.xlu0 %v145, 96
  %v617 = vpop.permute.xlu0 %616
  %618 = vrot.lane.b32.xlu0 %v149, 96
  %v619 = vpop.permute.xlu0 %618
  %vm620 = vcmp.lt.s32.totalorder %v19, 96
  %v621 = vsel %vm620, %v613, %v617
  %v622 = vsel %vm620, %v615, %v619
  %v623 = vsel %vm620, %v609, %v613
  %v624 = vsel %vm620, %v611, %v615
  %v625 = vsel %vm620, %v605, %v609
  %v626 = vsel %vm620, %v607, %v611
  %v627 = vsel %vm620, %v617, %v605
  %v628 = vsel %vm620, %v619, %v607
  %vm629 = vcmp.lt.s32.totalorder %v31, 14
  %vm630 = vcmp.lt.s32.totalorder %v32, 14
  %vm631 = vcmp.lt.s32.totalorder %v33, 14
  %vm632 = vcmp.lt.s32.totalorder %v34, 14
  %v633 = vsel %vm629, 1, 0
  %v634 = vsel %vm630, 1, 0
  %v635 = vsel %vm631, 1, 0
  %v636 = vsel %vm632, 1, 0
  %vm637 = vcmp.eq.s32.totalorder %v633, 1
  %vm638 = vcmp.eq.s32.totalorder %v634, 1
  %vm639 = vcmp.eq.s32.totalorder %v635, 1
  %vm640 = vcmp.eq.s32.totalorder %v636, 1
  %v641 = vsel %vm637, %v625, 0.0
  %v642 = vsel %vm638, %v623, 0.0
  %v643 = vsel %vm639, %v621, 0.0
  %v644 = vsel %vm640, %v627, 0.0
  %v645 = vsel %vm637, %v626, 0.0
  %v646 = vsel %vm638, %v624, 0.0
  %v647 = vsel %vm639, %v622, 0.0
  %v648 = vsel %vm640, %v628, 0.0
  %649 = vset.pattern.permute.xlu0 15
  %650 = vperm.xlu0 %649, %v11
  %v651 = vpop.permute.xlu0 %650
  %653 = vset.pattern.permute.xlu0 15
  %654 = vperm.xlu0 %653, %v12
  %v655 = vpop.permute.xlu0 %654
  %v657 = vmul.f32 %v651, %v641
  %v658 = vmul.f32 %v651, %v642
  %v659 = vmul.f32 %v651, %v643
  %v660 = vmul.f32 %v651, %v644
  %v661 = vmul.f32 %v655, %v645
  %v662 = vmul.f32 %v655, %v646
  %v663 = vmul.f32 %v655, %v647
  %v664 = vmul.f32 %v655, %v648
  %v665 = vadd.f32 %v596, %v657
  %v666 = vadd.f32 %v597, %v658
  %v667 = vadd.f32 %v598, %v659
  %v668 = vadd.f32 %v599, %v660
  %v669 = vadd.f32 %v600, %v661
  %v670 = vadd.f32 %v601, %v662
  %v671 = vadd.f32 %v602, %v663
  %v672 = vadd.f32 %v603, %v664
  %vm673 = vcmp.lt.s32.totalorder %v31, 13
  %vm674 = vcmp.lt.s32.totalorder %v32, 13
  %vm675 = vcmp.lt.s32.totalorder %v33, 13
  %vm676 = vcmp.lt.s32.totalorder %v34, 13
  %v677 = vsel %vm673, 1, 0
  %v678 = vsel %vm674, 1, 0
  %v679 = vsel %vm675, 1, 0
  %v680 = vsel %vm676, 1, 0
  %vm681 = vcmp.eq.s32.totalorder %v677, 1
  %vm682 = vcmp.eq.s32.totalorder %v678, 1
  %vm683 = vcmp.eq.s32.totalorder %v679, 1
  %vm684 = vcmp.eq.s32.totalorder %v680, 1
  %v685 = vsel %vm681, %v187, 0.0
  %v686 = vsel %vm682, %v185, 0.0
  %v687 = vsel %vm683, %v183, 0.0
  %v688 = vsel %vm684, %v189, 0.0
  %v689 = vsel %vm681, %v188, 0.0
  %v690 = vsel %vm682, %v186, 0.0
  %v691 = vsel %vm683, %v184, 0.0
  %v692 = vsel %vm684, %v190, 0.0
  %693 = vset.pattern.permute.xlu0 16
  %694 = vperm.xlu0 %693, %v11
  %v695 = vpop.permute.xlu0 %694
  %697 = vset.pattern.permute.xlu0 16
  %698 = vperm.xlu0 %697, %v12
  %v699 = vpop.permute.xlu0 %698
  %v701 = vmul.f32 %v695, %v685
  %v702 = vmul.f32 %v695, %v686
  %v703 = vmul.f32 %v695, %v687
  %v704 = vmul.f32 %v695, %v688
  %v705 = vmul.f32 %v699, %v689
  %v706 = vmul.f32 %v699, %v690
  %v707 = vmul.f32 %v699, %v691
  %v708 = vmul.f32 %v699, %v692
  %v709 = vadd.f32 %v665, %v701
  %v710 = vadd.f32 %v666, %v702
  %v711 = vadd.f32 %v667, %v703
  %v712 = vadd.f32 %v668, %v704
  %v713 = vadd.f32 %v669, %v705
  %v714 = vadd.f32 %v670, %v706
  %v715 = vadd.f32 %v671, %v707
  %v716 = vadd.f32 %v672, %v708
  %vm717 = vcmp.lt.s32.totalorder %v31, 12
  %vm718 = vcmp.lt.s32.totalorder %v32, 12
  %vm719 = vcmp.lt.s32.totalorder %v33, 12
  %vm720 = vcmp.lt.s32.totalorder %v34, 12
  %v721 = vsel %vm717, 1, 0
  %v722 = vsel %vm718, 1, 0
  %v723 = vsel %vm719, 1, 0
  %v724 = vsel %vm720, 1, 0
  %vm725 = vcmp.eq.s32.totalorder %v721, 1
  %vm726 = vcmp.eq.s32.totalorder %v722, 1
  %vm727 = vcmp.eq.s32.totalorder %v723, 1
  %vm728 = vcmp.eq.s32.totalorder %v724, 1
  %v729 = vsel %vm725, %v256, 0.0
  %v730 = vsel %vm726, %v254, 0.0
  %v731 = vsel %vm727, %v252, 0.0
  %v732 = vsel %vm728, %v258, 0.0
  %v733 = vsel %vm725, %v257, 0.0
  %v734 = vsel %vm726, %v255, 0.0
  %v735 = vsel %vm727, %v253, 0.0
  %v736 = vsel %vm728, %v259, 0.0
  %737 = vset.pattern.permute.xlu0 17
  %738 = vperm.xlu0 %737, %v11
  %v739 = vpop.permute.xlu0 %738
  %741 = vset.pattern.permute.xlu0 17
  %742 = vperm.xlu0 %741, %v12
  %v743 = vpop.permute.xlu0 %742
  %v745 = vmul.f32 %v739, %v729
  %v746 = vmul.f32 %v739, %v730
  %v747 = vmul.f32 %v739, %v731
  %v748 = vmul.f32 %v739, %v732
  %v749 = vmul.f32 %v743, %v733
  %v750 = vmul.f32 %v743, %v734
  %v751 = vmul.f32 %v743, %v735
  %v752 = vmul.f32 %v743, %v736
  %v753 = vadd.f32 %v709, %v745
  %v754 = vadd.f32 %v710, %v746
  %v755 = vadd.f32 %v711, %v747
  %v756 = vadd.f32 %v712, %v748
  %v757 = vadd.f32 %v713, %v749
  %v758 = vadd.f32 %v714, %v750
  %v759 = vadd.f32 %v715, %v751
  %v760 = vadd.f32 %v716, %v752
  %vm761 = vcmp.lt.s32.totalorder %v31, 11
  %vm762 = vcmp.lt.s32.totalorder %v32, 11
  %vm763 = vcmp.lt.s32.totalorder %v33, 11
  %vm764 = vcmp.lt.s32.totalorder %v34, 11
  %v765 = vsel %vm761, 1, 0
  %v766 = vsel %vm762, 1, 0
  %v767 = vsel %vm763, 1, 0
  %v768 = vsel %vm764, 1, 0
  %vm769 = vcmp.eq.s32.totalorder %v765, 1
  %vm770 = vcmp.eq.s32.totalorder %v766, 1
  %vm771 = vcmp.eq.s32.totalorder %v767, 1
  %vm772 = vcmp.eq.s32.totalorder %v768, 1
  %v773 = vsel %vm769, %v325, 0.0
  %v774 = vsel %vm770, %v323, 0.0
  %v775 = vsel %vm771, %v321, 0.0
  %v776 = vsel %vm772, %v327, 0.0
  %v777 = vsel %vm769, %v326, 0.0
  %v778 = vsel %vm770, %v324, 0.0
  %v779 = vsel %vm771, %v322, 0.0
  %v780 = vsel %vm772, %v328, 0.0
  %781 = vset.pattern.permute.xlu0 18
  %782 = vperm.xlu0 %781, %v11
  %v783 = vpop.permute.xlu0 %782
  %785 = vset.pattern.permute.xlu0 18
  %786 = vperm.xlu0 %785, %v12
  %v787 = vpop.permute.xlu0 %786
  %v789 = vmul.f32 %v783, %v773
  %v790 = vmul.f32 %v783, %v774
  %v791 = vmul.f32 %v783, %v775
  %v792 = vmul.f32 %v783, %v776
  %v793 = vmul.f32 %v787, %v777
  %v794 = vmul.f32 %v787, %v778
  %v795 = vmul.f32 %v787, %v779
  %v796 = vmul.f32 %v787, %v780
  %v797 = vadd.f32 %v753, %v789
  %v798 = vadd.f32 %v754, %v790
  %v799 = vadd.f32 %v755, %v791
  %v800 = vadd.f32 %v756, %v792
  %v801 = vadd.f32 %v757, %v793
  %v802 = vadd.f32 %v758, %v794
  %v803 = vadd.f32 %v759, %v795
  %v804 = vadd.f32 %v760, %v796
  %v805 = vmax.f32 %v797, 0.0
  %v806 = vmax.f32 %v798, 0.0
  %v807 = vmax.f32 %v799, 0.0
  %v808 = vmax.f32 %v800, 0.0
  %v809 = vmax.f32 %v801, 0.0
  %v810 = vmax.f32 %v802, 0.0
  %v811 = vmax.f32 %v803, 0.0
  %v812 = vmax.f32 %v804, 0.0
  %813 = vset.pattern.permute.xlu0 64
  %814 = vperm.xlu0 %813, %v11
  %v815 = vpop.permute.xlu0 %814
  %817 = vset.pattern.permute.xlu0 64
  %818 = vperm.xlu0 %817, %v12
  %v819 = vpop.permute.xlu0 %818
  %v821 = vadd.f32 %v805, %v815
  %v822 = vadd.f32 %v806, %v815
  %v823 = vadd.f32 %v807, %v815
  %v824 = vadd.f32 %v808, %v815
  %v825 = vadd.f32 %v809, %v819
  %v826 = vadd.f32 %v810, %v819
  %v827 = vadd.f32 %v811, %v819
  %v828 = vadd.f32 %v812, %v819
  %829 = vrot.lane.b32.xlu0 %v805, 5
  %v830 = vpop.permute.xlu0 %829
  %831 = vrot.lane.b32.xlu0 %v809, 5
  %v832 = vpop.permute.xlu0 %831
  %833 = vrot.lane.b32.xlu0 %v806, 5
  %v834 = vpop.permute.xlu0 %833
  %835 = vrot.lane.b32.xlu0 %v810, 5
  %v836 = vpop.permute.xlu0 %835
  %837 = vrot.lane.b32.xlu0 %v807, 5
  %v838 = vpop.permute.xlu0 %837
  %839 = vrot.lane.b32.xlu0 %v811, 5
  %v840 = vpop.permute.xlu0 %839
  %841 = vrot.lane.b32.xlu0 %v808, 5
  %v842 = vpop.permute.xlu0 %841
  %843 = vrot.lane.b32.xlu0 %v812, 5
  %v844 = vpop.permute.xlu0 %843
  %vm845 = vcmp.lt.s32.totalorder %v19, 5
  %v846 = vsel %vm845, %v838, %v842
  %v847 = vsel %vm845, %v840, %v844
  %v848 = vsel %vm845, %v834, %v838
  %v849 = vsel %vm845, %v836, %v840
  %v850 = vsel %vm845, %v830, %v834
  %v851 = vsel %vm845, %v832, %v836
  %v852 = vsel %vm845, %v842, %v830
  %v853 = vsel %vm845, %v844, %v832
  %vm854 = vcmp.ge.s32.totalorder %v23, 5
  %vm855 = vcmp.ge.s32.totalorder %v24, 5
  %vm856 = vcmp.ge.s32.totalorder %v25, 5
  %vm857 = vcmp.ge.s32.totalorder %v26, 5
  %v858 = vsel %vm854, 1, 0
  %v859 = vsel %vm855, 1, 0
  %v860 = vsel %vm856, 1, 0
  %v861 = vsel %vm857, 1, 0
  %vm862 = vcmp.eq.s32.totalorder %v858, 1
  %vm863 = vcmp.eq.s32.totalorder %v859, 1
  %vm864 = vcmp.eq.s32.totalorder %v860, 1
  %vm865 = vcmp.eq.s32.totalorder %v861, 1
  %v866 = vsel %vm862, %v852, 0.0
  %v867 = vsel %vm863, %v850, 0.0
  %v868 = vsel %vm864, %v848, 0.0
  %v869 = vsel %vm865, %v846, 0.0
  %v870 = vsel %vm862, %v853, 0.0
  %v871 = vsel %vm863, %v851, 0.0
  %v872 = vsel %vm864, %v849, 0.0
  %v873 = vsel %vm865, %v847, 0.0
  %874 = vset.pattern.permute.xlu0 19
  %875 = vperm.xlu0 %874, %v11
  %v876 = vpop.permute.xlu0 %875
  %878 = vset.pattern.permute.xlu0 19
  %879 = vperm.xlu0 %878, %v12
  %v880 = vpop.permute.xlu0 %879
  %v882 = vmul.f32 %v876, %v866
  %v883 = vmul.f32 %v876, %v867
  %v884 = vmul.f32 %v876, %v868
  %v885 = vmul.f32 %v876, %v869
  %v886 = vmul.f32 %v880, %v870
  %v887 = vmul.f32 %v880, %v871
  %v888 = vmul.f32 %v880, %v872
  %v889 = vmul.f32 %v880, %v873
  %v890 = vadd.f32 %v821, %v882
  %v891 = vadd.f32 %v822, %v883
  %v892 = vadd.f32 %v823, %v884
  %v893 = vadd.f32 %v824, %v885
  %v894 = vadd.f32 %v825, %v886
  %v895 = vadd.f32 %v826, %v887
  %v896 = vadd.f32 %v827, %v888
  %v897 = vadd.f32 %v828, %v889
  %898 = vrot.lane.b32.xlu0 %v805, 4
  %v899 = vpop.permute.xlu0 %898
  %900 = vrot.lane.b32.xlu0 %v809, 4
  %v901 = vpop.permute.xlu0 %900
  %902 = vrot.lane.b32.xlu0 %v806, 4
  %v903 = vpop.permute.xlu0 %902
  %904 = vrot.lane.b32.xlu0 %v810, 4
  %v905 = vpop.permute.xlu0 %904
  %906 = vrot.lane.b32.xlu0 %v807, 4
  %v907 = vpop.permute.xlu0 %906
  %908 = vrot.lane.b32.xlu0 %v811, 4
  %v909 = vpop.permute.xlu0 %908
  %910 = vrot.lane.b32.xlu0 %v808, 4
  %v911 = vpop.permute.xlu0 %910
  %912 = vrot.lane.b32.xlu0 %v812, 4
  %v913 = vpop.permute.xlu0 %912
  %vm914 = vcmp.lt.s32.totalorder %v19, 4
  %v915 = vsel %vm914, %v907, %v911
  %v916 = vsel %vm914, %v909, %v913
  %v917 = vsel %vm914, %v903, %v907
  %v918 = vsel %vm914, %v905, %v909
  %v919 = vsel %vm914, %v899, %v903
  %v920 = vsel %vm914, %v901, %v905
  %v921 = vsel %vm914, %v911, %v899
  %v922 = vsel %vm914, %v913, %v901
  %vm923 = vcmp.ge.s32.totalorder %v23, 4
  %vm924 = vcmp.ge.s32.totalorder %v24, 4
  %vm925 = vcmp.ge.s32.totalorder %v25, 4
  %vm926 = vcmp.ge.s32.totalorder %v26, 4
  %v927 = vsel %vm923, 1, 0
  %v928 = vsel %vm924, 1, 0
  %v929 = vsel %vm925, 1, 0
  %v930 = vsel %vm926, 1, 0
  %vm931 = vcmp.eq.s32.totalorder %v927, 1
  %vm932 = vcmp.eq.s32.totalorder %v928, 1
  %vm933 = vcmp.eq.s32.totalorder %v929, 1
  %vm934 = vcmp.eq.s32.totalorder %v930, 1
  %v935 = vsel %vm931, %v921, 0.0
  %v936 = vsel %vm932, %v919, 0.0
  %v937 = vsel %vm933, %v917, 0.0
  %v938 = vsel %vm934, %v915, 0.0
  %v939 = vsel %vm931, %v922, 0.0
  %v940 = vsel %vm932, %v920, 0.0
  %v941 = vsel %vm933, %v918, 0.0
  %v942 = vsel %vm934, %v916, 0.0
  %943 = vset.pattern.permute.xlu0 20
  %944 = vperm.xlu0 %943, %v11
  %v945 = vpop.permute.xlu0 %944
  %947 = vset.pattern.permute.xlu0 20
  %948 = vperm.xlu0 %947, %v12
  %v949 = vpop.permute.xlu0 %948
  %v951 = vmul.f32 %v945, %v935
  %v952 = vmul.f32 %v945, %v936
  %v953 = vmul.f32 %v945, %v937
  %v954 = vmul.f32 %v945, %v938
  %v955 = vmul.f32 %v949, %v939
  %v956 = vmul.f32 %v949, %v940
  %v957 = vmul.f32 %v949, %v941
  %v958 = vmul.f32 %v949, %v942
  %v959 = vadd.f32 %v890, %v951
  %v960 = vadd.f32 %v891, %v952
  %v961 = vadd.f32 %v892, %v953
  %v962 = vadd.f32 %v893, %v954
  %v963 = vadd.f32 %v894, %v955
  %v964 = vadd.f32 %v895, %v956
  %v965 = vadd.f32 %v896, %v957
  %v966 = vadd.f32 %v897, %v958
  %967 = vrot.lane.b32.xlu0 %v805, 3
  %v968 = vpop.permute.xlu0 %967
  %969 = vrot.lane.b32.xlu0 %v809, 3
  %v970 = vpop.permute.xlu0 %969
  %971 = vrot.lane.b32.xlu0 %v806, 3
  %v972 = vpop.permute.xlu0 %971
  %973 = vrot.lane.b32.xlu0 %v810, 3
  %v974 = vpop.permute.xlu0 %973
  %975 = vrot.lane.b32.xlu0 %v807, 3
  %v976 = vpop.permute.xlu0 %975
  %977 = vrot.lane.b32.xlu0 %v811, 3
  %v978 = vpop.permute.xlu0 %977
  %979 = vrot.lane.b32.xlu0 %v808, 3
  %v980 = vpop.permute.xlu0 %979
  %981 = vrot.lane.b32.xlu0 %v812, 3
  %v982 = vpop.permute.xlu0 %981
  %vm983 = vcmp.lt.s32.totalorder %v19, 3
  %v984 = vsel %vm983, %v976, %v980
  %v985 = vsel %vm983, %v978, %v982
  %v986 = vsel %vm983, %v972, %v976
  %v987 = vsel %vm983, %v974, %v978
  %v988 = vsel %vm983, %v968, %v972
  %v989 = vsel %vm983, %v970, %v974
  %v990 = vsel %vm983, %v980, %v968
  %v991 = vsel %vm983, %v982, %v970
  %vm992 = vcmp.ge.s32.totalorder %v23, 3
  %vm993 = vcmp.ge.s32.totalorder %v24, 3
  %vm994 = vcmp.ge.s32.totalorder %v25, 3
  %vm995 = vcmp.ge.s32.totalorder %v26, 3
  %v996 = vsel %vm992, 1, 0
  %v997 = vsel %vm993, 1, 0
  %v998 = vsel %vm994, 1, 0
  %v999 = vsel %vm995, 1, 0
  %vm1000 = vcmp.eq.s32.totalorder %v996, 1
  %vm1001 = vcmp.eq.s32.totalorder %v997, 1
  %vm1002 = vcmp.eq.s32.totalorder %v998, 1
  %vm1003 = vcmp.eq.s32.totalorder %v999, 1
  %v1004 = vsel %vm1000, %v990, 0.0
  %v1005 = vsel %vm1001, %v988, 0.0
  %v1006 = vsel %vm1002, %v986, 0.0
  %v1007 = vsel %vm1003, %v984, 0.0
  %v1008 = vsel %vm1000, %v991, 0.0
  %v1009 = vsel %vm1001, %v989, 0.0
  %v1010 = vsel %vm1002, %v987, 0.0
  %v1011 = vsel %vm1003, %v985, 0.0
  %1012 = vset.pattern.permute.xlu0 21
  %1013 = vperm.xlu0 %1012, %v11
  %v1014 = vpop.permute.xlu0 %1013
  %1016 = vset.pattern.permute.xlu0 21
  %1017 = vperm.xlu0 %1016, %v12
  %v1018 = vpop.permute.xlu0 %1017
  %v1020 = vmul.f32 %v1014, %v1004
  %v1021 = vmul.f32 %v1014, %v1005
  %v1022 = vmul.f32 %v1014, %v1006
  %v1023 = vmul.f32 %v1014, %v1007
  %v1024 = vmul.f32 %v1018, %v1008
  %v1025 = vmul.f32 %v1018, %v1009
  %v1026 = vmul.f32 %v1018, %v1010
  %v1027 = vmul.f32 %v1018, %v1011
  %v1028 = vadd.f32 %v959, %v1020
  %v1029 = vadd.f32 %v960, %v1021
  %v1030 = vadd.f32 %v961, %v1022
  %v1031 = vadd.f32 %v962, %v1023
  %v1032 = vadd.f32 %v963, %v1024
  %v1033 = vadd.f32 %v964, %v1025
  %v1034 = vadd.f32 %v965, %v1026
  %v1035 = vadd.f32 %v966, %v1027
  %1036 = vrot.lane.b32.xlu0 %v805, 2
  %v1037 = vpop.permute.xlu0 %1036
  %1038 = vrot.lane.b32.xlu0 %v809, 2
  %v1039 = vpop.permute.xlu0 %1038
  %1040 = vrot.lane.b32.xlu0 %v806, 2
  %v1041 = vpop.permute.xlu0 %1040
  %1042 = vrot.lane.b32.xlu0 %v810, 2
  %v1043 = vpop.permute.xlu0 %1042
  %1044 = vrot.lane.b32.xlu0 %v807, 2
  %v1045 = vpop.permute.xlu0 %1044
  %1046 = vrot.lane.b32.xlu0 %v811, 2
  %v1047 = vpop.permute.xlu0 %1046
  %1048 = vrot.lane.b32.xlu0 %v808, 2
  %v1049 = vpop.permute.xlu0 %1048
  %1050 = vrot.lane.b32.xlu0 %v812, 2
  %v1051 = vpop.permute.xlu0 %1050
  %vm1052 = vcmp.lt.s32.totalorder %v19, 2
  %v1053 = vsel %vm1052, %v1045, %v1049
  %v1054 = vsel %vm1052, %v1047, %v1051
  %v1055 = vsel %vm1052, %v1041, %v1045
  %v1056 = vsel %vm1052, %v1043, %v1047
  %v1057 = vsel %vm1052, %v1037, %v1041
  %v1058 = vsel %vm1052, %v1039, %v1043
  %v1059 = vsel %vm1052, %v1049, %v1037
  %v1060 = vsel %vm1052, %v1051, %v1039
  %vm1061 = vcmp.ge.s32.totalorder %v23, 2
  %vm1062 = vcmp.ge.s32.totalorder %v24, 2
  %vm1063 = vcmp.ge.s32.totalorder %v25, 2
  %vm1064 = vcmp.ge.s32.totalorder %v26, 2
  %v1065 = vsel %vm1061, 1, 0
  %v1066 = vsel %vm1062, 1, 0
  %v1067 = vsel %vm1063, 1, 0
  %v1068 = vsel %vm1064, 1, 0
  %vm1069 = vcmp.eq.s32.totalorder %v1065, 1
  %vm1070 = vcmp.eq.s32.totalorder %v1066, 1
  %vm1071 = vcmp.eq.s32.totalorder %v1067, 1
  %vm1072 = vcmp.eq.s32.totalorder %v1068, 1
  %v1073 = vsel %vm1069, %v1059, 0.0
  %v1074 = vsel %vm1070, %v1057, 0.0
  %v1075 = vsel %vm1071, %v1055, 0.0
  %v1076 = vsel %vm1072, %v1053, 0.0
  %v1077 = vsel %vm1069, %v1060, 0.0
  %v1078 = vsel %vm1070, %v1058, 0.0
  %v1079 = vsel %vm1071, %v1056, 0.0
  %v1080 = vsel %vm1072, %v1054, 0.0
  %1081 = vset.pattern.permute.xlu0 22
  %1082 = vperm.xlu0 %1081, %v11
  %v1083 = vpop.permute.xlu0 %1082
  %1085 = vset.pattern.permute.xlu0 22
  %1086 = vperm.xlu0 %1085, %v12
  %v1087 = vpop.permute.xlu0 %1086
  %v1089 = vmul.f32 %v1083, %v1073
  %v1090 = vmul.f32 %v1083, %v1074
  %v1091 = vmul.f32 %v1083, %v1075
  %v1092 = vmul.f32 %v1083, %v1076
  %v1093 = vmul.f32 %v1087, %v1077
  %v1094 = vmul.f32 %v1087, %v1078
  %v1095 = vmul.f32 %v1087, %v1079
  %v1096 = vmul.f32 %v1087, %v1080
  %v1097 = vadd.f32 %v1028, %v1089
  %v1098 = vadd.f32 %v1029, %v1090
  %v1099 = vadd.f32 %v1030, %v1091
  %v1100 = vadd.f32 %v1031, %v1092
  %v1101 = vadd.f32 %v1032, %v1093
  %v1102 = vadd.f32 %v1033, %v1094
  %v1103 = vadd.f32 %v1034, %v1095
  %v1104 = vadd.f32 %v1035, %v1096
  %1105 = vrot.lane.b32.xlu0 %v805, 1
  %v1106 = vpop.permute.xlu0 %1105
  %1107 = vrot.lane.b32.xlu0 %v809, 1
  %v1108 = vpop.permute.xlu0 %1107
  %1109 = vrot.lane.b32.xlu0 %v806, 1
  %v1110 = vpop.permute.xlu0 %1109
  %1111 = vrot.lane.b32.xlu0 %v810, 1
  %v1112 = vpop.permute.xlu0 %1111
  %1113 = vrot.lane.b32.xlu0 %v807, 1
  %v1114 = vpop.permute.xlu0 %1113
  %1115 = vrot.lane.b32.xlu0 %v811, 1
  %v1116 = vpop.permute.xlu0 %1115
  %1117 = vrot.lane.b32.xlu0 %v808, 1
  %v1118 = vpop.permute.xlu0 %1117
  %1119 = vrot.lane.b32.xlu0 %v812, 1
  %v1120 = vpop.permute.xlu0 %1119
  %vm1121 = vcmp.lt.s32.totalorder %v19, 1
  %v1122 = vsel %vm1121, %v1114, %v1118
  %v1123 = vsel %vm1121, %v1116, %v1120
  %v1124 = vsel %vm1121, %v1110, %v1114
  %v1125 = vsel %vm1121, %v1112, %v1116
  %v1126 = vsel %vm1121, %v1106, %v1110
  %v1127 = vsel %vm1121, %v1108, %v1112
  %v1128 = vsel %vm1121, %v1118, %v1106
  %v1129 = vsel %vm1121, %v1120, %v1108
  %vm1130 = vcmp.ge.s32.totalorder %v23, 1
  %vm1131 = vcmp.ge.s32.totalorder %v24, 1
  %vm1132 = vcmp.ge.s32.totalorder %v25, 1
  %vm1133 = vcmp.ge.s32.totalorder %v26, 1
  %v1134 = vsel %vm1130, 1, 0
  %v1135 = vsel %vm1131, 1, 0
  %v1136 = vsel %vm1132, 1, 0
  %v1137 = vsel %vm1133, 1, 0
  %vm1138 = vcmp.eq.s32.totalorder %v1134, 1
  %vm1139 = vcmp.eq.s32.totalorder %v1135, 1
  %vm1140 = vcmp.eq.s32.totalorder %v1136, 1
  %vm1141 = vcmp.eq.s32.totalorder %v1137, 1
  %v1142 = vsel %vm1138, %v1128, 0.0
  %v1143 = vsel %vm1139, %v1126, 0.0
  %v1144 = vsel %vm1140, %v1124, 0.0
  %v1145 = vsel %vm1141, %v1122, 0.0
  %v1146 = vsel %vm1138, %v1129, 0.0
  %v1147 = vsel %vm1139, %v1127, 0.0
  %v1148 = vsel %vm1140, %v1125, 0.0
  %v1149 = vsel %vm1141, %v1123, 0.0
  %1150 = vset.pattern.permute.xlu0 23
  %1151 = vperm.xlu0 %1150, %v11
  %v1152 = vpop.permute.xlu0 %1151
  %1154 = vset.pattern.permute.xlu0 23
  %1155 = vperm.xlu0 %1154, %v12
  %v1156 = vpop.permute.xlu0 %1155
  %v1158 = vmul.f32 %v1152, %v1142
  %v1159 = vmul.f32 %v1152, %v1143
  %v1160 = vmul.f32 %v1152, %v1144
  %v1161 = vmul.f32 %v1152, %v1145
  %v1162 = vmul.f32 %v1156, %v1146
  %v1163 = vmul.f32 %v1156, %v1147
  %v1164 = vmul.f32 %v1156, %v1148
  %v1165 = vmul.f32 %v1156, %v1149
  %v1166 = vadd.f32 %v1097, %v1158
  %v1167 = vadd.f32 %v1098, %v1159
  %v1168 = vadd.f32 %v1099, %v1160
  %v1169 = vadd.f32 %v1100, %v1161
  %v1170 = vadd.f32 %v1101, %v1162
  %v1171 = vadd.f32 %v1102, %v1163
  %v1172 = vadd.f32 %v1103, %v1164
  %v1173 = vadd.f32 %v1104, %v1165
  %1174 = vset.pattern.permute.xlu0 24
  %1175 = vperm.xlu0 %1174, %v11
  %v1176 = vpop.permute.xlu0 %1175
  %1178 = vset.pattern.permute.xlu0 24
  %1179 = vperm.xlu0 %1178, %v12
  %v1180 = vpop.permute.xlu0 %1179
  %v1182 = vmul.f32 %v1176, %v805
  %v1183 = vmul.f32 %v1176, %v806
  %v1184 = vmul.f32 %v1176, %v807
  %v1185 = vmul.f32 %v1176, %v808
  %v1186 = vmul.f32 %v1180, %v809
  %v1187 = vmul.f32 %v1180, %v810
  %v1188 = vmul.f32 %v1180, %v811
  %v1189 = vmul.f32 %v1180, %v812
  %v1190 = vadd.f32 %v1166, %v1182
  %v1191 = vadd.f32 %v1167, %v1183
  %v1192 = vadd.f32 %v1168, %v1184
  %v1193 = vadd.f32 %v1169, %v1185
  %v1194 = vadd.f32 %v1170, %v1186
  %v1195 = vadd.f32 %v1171, %v1187
  %v1196 = vadd.f32 %v1172, %v1188
  %v1197 = vadd.f32 %v1173, %v1189
  %1198 = vrot.lane.b32.xlu0 %v805, 127
  %v1199 = vpop.permute.xlu0 %1198
  %1200 = vrot.lane.b32.xlu0 %v809, 127
  %v1201 = vpop.permute.xlu0 %1200
  %1202 = vrot.lane.b32.xlu0 %v806, 127
  %v1203 = vpop.permute.xlu0 %1202
  %1204 = vrot.lane.b32.xlu0 %v810, 127
  %v1205 = vpop.permute.xlu0 %1204
  %1206 = vrot.lane.b32.xlu0 %v807, 127
  %v1207 = vpop.permute.xlu0 %1206
  %1208 = vrot.lane.b32.xlu0 %v811, 127
  %v1209 = vpop.permute.xlu0 %1208
  %1210 = vrot.lane.b32.xlu0 %v808, 127
  %v1211 = vpop.permute.xlu0 %1210
  %1212 = vrot.lane.b32.xlu0 %v812, 127
  %v1213 = vpop.permute.xlu0 %1212
  %vm1214 = vcmp.lt.s32.totalorder %v19, 127
  %v1215 = vsel %vm1214, %v1207, %v1211
  %v1216 = vsel %vm1214, %v1209, %v1213
  %v1217 = vsel %vm1214, %v1203, %v1207
  %v1218 = vsel %vm1214, %v1205, %v1209
  %v1219 = vsel %vm1214, %v1199, %v1203
  %v1220 = vsel %vm1214, %v1201, %v1205
  %v1221 = vsel %vm1214, %v1211, %v1199
  %v1222 = vsel %vm1214, %v1213, %v1201
  %vm1223 = vcmp.lt.s32.totalorder %v23, 15
  %vm1224 = vcmp.lt.s32.totalorder %v24, 15
  %vm1225 = vcmp.lt.s32.totalorder %v25, 15
  %vm1226 = vcmp.lt.s32.totalorder %v26, 15
  %v1227 = vsel %vm1223, 1, 0
  %v1228 = vsel %vm1224, 1, 0
  %v1229 = vsel %vm1225, 1, 0
  %v1230 = vsel %vm1226, 1, 0
  %vm1231 = vcmp.eq.s32.totalorder %v1227, 1
  %vm1232 = vcmp.eq.s32.totalorder %v1228, 1
  %vm1233 = vcmp.eq.s32.totalorder %v1229, 1
  %vm1234 = vcmp.eq.s32.totalorder %v1230, 1
  %v1235 = vsel %vm1231, %v1219, 0.0
  %v1236 = vsel %vm1232, %v1217, 0.0
  %v1237 = vsel %vm1233, %v1215, 0.0
  %v1238 = vsel %vm1234, %v1221, 0.0
  %v1239 = vsel %vm1231, %v1220, 0.0
  %v1240 = vsel %vm1232, %v1218, 0.0
  %v1241 = vsel %vm1233, %v1216, 0.0
  %v1242 = vsel %vm1234, %v1222, 0.0
  %1243 = vset.pattern.permute.xlu0 25
  %1244 = vperm.xlu0 %1243, %v11
  %v1245 = vpop.permute.xlu0 %1244
  %1247 = vset.pattern.permute.xlu0 25
  %1248 = vperm.xlu0 %1247, %v12
  %v1249 = vpop.permute.xlu0 %1248
  %v1251 = vmul.f32 %v1245, %v1235
  %v1252 = vmul.f32 %v1245, %v1236
  %v1253 = vmul.f32 %v1245, %v1237
  %v1254 = vmul.f32 %v1245, %v1238
  %v1255 = vmul.f32 %v1249, %v1239
  %v1256 = vmul.f32 %v1249, %v1240
  %v1257 = vmul.f32 %v1249, %v1241
  %v1258 = vmul.f32 %v1249, %v1242
  %v1259 = vadd.f32 %v1190, %v1251
  %v1260 = vadd.f32 %v1191, %v1252
  %v1261 = vadd.f32 %v1192, %v1253
  %v1262 = vadd.f32 %v1193, %v1254
  %v1263 = vadd.f32 %v1194, %v1255
  %v1264 = vadd.f32 %v1195, %v1256
  %v1265 = vadd.f32 %v1196, %v1257
  %v1266 = vadd.f32 %v1197, %v1258
  %1267 = vrot.lane.b32.xlu0 %v805, 126
  %v1268 = vpop.permute.xlu0 %1267
  %1269 = vrot.lane.b32.xlu0 %v809, 126
  %v1270 = vpop.permute.xlu0 %1269
  %1271 = vrot.lane.b32.xlu0 %v806, 126
  %v1272 = vpop.permute.xlu0 %1271
  %1273 = vrot.lane.b32.xlu0 %v810, 126
  %v1274 = vpop.permute.xlu0 %1273
  %1275 = vrot.lane.b32.xlu0 %v807, 126
  %v1276 = vpop.permute.xlu0 %1275
  %1277 = vrot.lane.b32.xlu0 %v811, 126
  %v1278 = vpop.permute.xlu0 %1277
  %1279 = vrot.lane.b32.xlu0 %v808, 126
  %v1280 = vpop.permute.xlu0 %1279
  %1281 = vrot.lane.b32.xlu0 %v812, 126
  %v1282 = vpop.permute.xlu0 %1281
  %vm1283 = vcmp.lt.s32.totalorder %v19, 126
  %v1284 = vsel %vm1283, %v1276, %v1280
  %v1285 = vsel %vm1283, %v1278, %v1282
  %v1286 = vsel %vm1283, %v1272, %v1276
  %v1287 = vsel %vm1283, %v1274, %v1278
  %v1288 = vsel %vm1283, %v1268, %v1272
  %v1289 = vsel %vm1283, %v1270, %v1274
  %v1290 = vsel %vm1283, %v1280, %v1268
  %v1291 = vsel %vm1283, %v1282, %v1270
  %vm1292 = vcmp.lt.s32.totalorder %v23, 14
  %vm1293 = vcmp.lt.s32.totalorder %v24, 14
  %vm1294 = vcmp.lt.s32.totalorder %v25, 14
  %vm1295 = vcmp.lt.s32.totalorder %v26, 14
  %v1296 = vsel %vm1292, 1, 0
  %v1297 = vsel %vm1293, 1, 0
  %v1298 = vsel %vm1294, 1, 0
  %v1299 = vsel %vm1295, 1, 0
  %vm1300 = vcmp.eq.s32.totalorder %v1296, 1
  %vm1301 = vcmp.eq.s32.totalorder %v1297, 1
  %vm1302 = vcmp.eq.s32.totalorder %v1298, 1
  %vm1303 = vcmp.eq.s32.totalorder %v1299, 1
  %v1304 = vsel %vm1300, %v1288, 0.0
  %v1305 = vsel %vm1301, %v1286, 0.0
  %v1306 = vsel %vm1302, %v1284, 0.0
  %v1307 = vsel %vm1303, %v1290, 0.0
  %v1308 = vsel %vm1300, %v1289, 0.0
  %v1309 = vsel %vm1301, %v1287, 0.0
  %v1310 = vsel %vm1302, %v1285, 0.0
  %v1311 = vsel %vm1303, %v1291, 0.0
  %1312 = vset.pattern.permute.xlu0 26
  %1313 = vperm.xlu0 %1312, %v11
  %v1314 = vpop.permute.xlu0 %1313
  %1316 = vset.pattern.permute.xlu0 26
  %1317 = vperm.xlu0 %1316, %v12
  %v1318 = vpop.permute.xlu0 %1317
  %v1320 = vmul.f32 %v1314, %v1304
  %v1321 = vmul.f32 %v1314, %v1305
  %v1322 = vmul.f32 %v1314, %v1306
  %v1323 = vmul.f32 %v1314, %v1307
  %v1324 = vmul.f32 %v1318, %v1308
  %v1325 = vmul.f32 %v1318, %v1309
  %v1326 = vmul.f32 %v1318, %v1310
  %v1327 = vmul.f32 %v1318, %v1311
  %v1328 = vadd.f32 %v1259, %v1320
  %v1329 = vadd.f32 %v1260, %v1321
  %v1330 = vadd.f32 %v1261, %v1322
  %v1331 = vadd.f32 %v1262, %v1323
  %v1332 = vadd.f32 %v1263, %v1324
  %v1333 = vadd.f32 %v1264, %v1325
  %v1334 = vadd.f32 %v1265, %v1326
  %v1335 = vadd.f32 %v1266, %v1327
  %1336 = vrot.lane.b32.xlu0 %v805, 125
  %v1337 = vpop.permute.xlu0 %1336
  %1338 = vrot.lane.b32.xlu0 %v809, 125
  %v1339 = vpop.permute.xlu0 %1338
  %1340 = vrot.lane.b32.xlu0 %v806, 125
  %v1341 = vpop.permute.xlu0 %1340
  %1342 = vrot.lane.b32.xlu0 %v810, 125
  %v1343 = vpop.permute.xlu0 %1342
  %1344 = vrot.lane.b32.xlu0 %v807, 125
  %v1345 = vpop.permute.xlu0 %1344
  %1346 = vrot.lane.b32.xlu0 %v811, 125
  %v1347 = vpop.permute.xlu0 %1346
  %1348 = vrot.lane.b32.xlu0 %v808, 125
  %v1349 = vpop.permute.xlu0 %1348
  %1350 = vrot.lane.b32.xlu0 %v812, 125
  %v1351 = vpop.permute.xlu0 %1350
  %vm1352 = vcmp.lt.s32.totalorder %v19, 125
  %v1353 = vsel %vm1352, %v1345, %v1349
  %v1354 = vsel %vm1352, %v1347, %v1351
  %v1355 = vsel %vm1352, %v1341, %v1345
  %v1356 = vsel %vm1352, %v1343, %v1347
  %v1357 = vsel %vm1352, %v1337, %v1341
  %v1358 = vsel %vm1352, %v1339, %v1343
  %v1359 = vsel %vm1352, %v1349, %v1337
  %v1360 = vsel %vm1352, %v1351, %v1339
  %vm1361 = vcmp.lt.s32.totalorder %v23, 13
  %vm1362 = vcmp.lt.s32.totalorder %v24, 13
  %vm1363 = vcmp.lt.s32.totalorder %v25, 13
  %vm1364 = vcmp.lt.s32.totalorder %v26, 13
  %v1365 = vsel %vm1361, 1, 0
  %v1366 = vsel %vm1362, 1, 0
  %v1367 = vsel %vm1363, 1, 0
  %v1368 = vsel %vm1364, 1, 0
  %vm1369 = vcmp.eq.s32.totalorder %v1365, 1
  %vm1370 = vcmp.eq.s32.totalorder %v1366, 1
  %vm1371 = vcmp.eq.s32.totalorder %v1367, 1
  %vm1372 = vcmp.eq.s32.totalorder %v1368, 1
  %v1373 = vsel %vm1369, %v1357, 0.0
  %v1374 = vsel %vm1370, %v1355, 0.0
  %v1375 = vsel %vm1371, %v1353, 0.0
  %v1376 = vsel %vm1372, %v1359, 0.0
  %v1377 = vsel %vm1369, %v1358, 0.0
  %v1378 = vsel %vm1370, %v1356, 0.0
  %v1379 = vsel %vm1371, %v1354, 0.0
  %v1380 = vsel %vm1372, %v1360, 0.0
  %1381 = vset.pattern.permute.xlu0 27
  %1382 = vperm.xlu0 %1381, %v11
  %v1383 = vpop.permute.xlu0 %1382
  %1385 = vset.pattern.permute.xlu0 27
  %1386 = vperm.xlu0 %1385, %v12
  %v1387 = vpop.permute.xlu0 %1386
  %v1389 = vmul.f32 %v1383, %v1373
  %v1390 = vmul.f32 %v1383, %v1374
  %v1391 = vmul.f32 %v1383, %v1375
  %v1392 = vmul.f32 %v1383, %v1376
  %v1393 = vmul.f32 %v1387, %v1377
  %v1394 = vmul.f32 %v1387, %v1378
  %v1395 = vmul.f32 %v1387, %v1379
  %v1396 = vmul.f32 %v1387, %v1380
  %v1397 = vadd.f32 %v1328, %v1389
  %v1398 = vadd.f32 %v1329, %v1390
  %v1399 = vadd.f32 %v1330, %v1391
  %v1400 = vadd.f32 %v1331, %v1392
  %v1401 = vadd.f32 %v1332, %v1393
  %v1402 = vadd.f32 %v1333, %v1394
  %v1403 = vadd.f32 %v1334, %v1395
  %v1404 = vadd.f32 %v1335, %v1396
  %1405 = vrot.lane.b32.xlu0 %v805, 124
  %v1406 = vpop.permute.xlu0 %1405
  %1407 = vrot.lane.b32.xlu0 %v809, 124
  %v1408 = vpop.permute.xlu0 %1407
  %1409 = vrot.lane.b32.xlu0 %v806, 124
  %v1410 = vpop.permute.xlu0 %1409
  %1411 = vrot.lane.b32.xlu0 %v810, 124
  %v1412 = vpop.permute.xlu0 %1411
  %1413 = vrot.lane.b32.xlu0 %v807, 124
  %v1414 = vpop.permute.xlu0 %1413
  %1415 = vrot.lane.b32.xlu0 %v811, 124
  %v1416 = vpop.permute.xlu0 %1415
  %1417 = vrot.lane.b32.xlu0 %v808, 124
  %v1418 = vpop.permute.xlu0 %1417
  %1419 = vrot.lane.b32.xlu0 %v812, 124
  %v1420 = vpop.permute.xlu0 %1419
  %vm1421 = vcmp.lt.s32.totalorder %v19, 124
  %v1422 = vsel %vm1421, %v1414, %v1418
  %v1423 = vsel %vm1421, %v1416, %v1420
  %v1424 = vsel %vm1421, %v1410, %v1414
  %v1425 = vsel %vm1421, %v1412, %v1416
  %v1426 = vsel %vm1421, %v1406, %v1410
  %v1427 = vsel %vm1421, %v1408, %v1412
  %v1428 = vsel %vm1421, %v1418, %v1406
  %v1429 = vsel %vm1421, %v1420, %v1408
  %vm1430 = vcmp.lt.s32.totalorder %v23, 12
  %vm1431 = vcmp.lt.s32.totalorder %v24, 12
  %vm1432 = vcmp.lt.s32.totalorder %v25, 12
  %vm1433 = vcmp.lt.s32.totalorder %v26, 12
  %v1434 = vsel %vm1430, 1, 0
  %v1435 = vsel %vm1431, 1, 0
  %v1436 = vsel %vm1432, 1, 0
  %v1437 = vsel %vm1433, 1, 0
  %vm1438 = vcmp.eq.s32.totalorder %v1434, 1
  %vm1439 = vcmp.eq.s32.totalorder %v1435, 1
  %vm1440 = vcmp.eq.s32.totalorder %v1436, 1
  %vm1441 = vcmp.eq.s32.totalorder %v1437, 1
  %v1442 = vsel %vm1438, %v1426, 0.0
  %v1443 = vsel %vm1439, %v1424, 0.0
  %v1444 = vsel %vm1440, %v1422, 0.0
  %v1445 = vsel %vm1441, %v1428, 0.0
  %v1446 = vsel %vm1438, %v1427, 0.0
  %v1447 = vsel %vm1439, %v1425, 0.0
  %v1448 = vsel %vm1440, %v1423, 0.0
  %v1449 = vsel %vm1441, %v1429, 0.0
  %1450 = vset.pattern.permute.xlu0 28
  %1451 = vperm.xlu0 %1450, %v11
  %v1452 = vpop.permute.xlu0 %1451
  %1454 = vset.pattern.permute.xlu0 28
  %1455 = vperm.xlu0 %1454, %v12
  %v1456 = vpop.permute.xlu0 %1455
  %v1458 = vmul.f32 %v1452, %v1442
  %v1459 = vmul.f32 %v1452, %v1443
  %v1460 = vmul.f32 %v1452, %v1444
  %v1461 = vmul.f32 %v1452, %v1445
  %v1462 = vmul.f32 %v1456, %v1446
  %v1463 = vmul.f32 %v1456, %v1447
  %v1464 = vmul.f32 %v1456, %v1448
  %v1465 = vmul.f32 %v1456, %v1449
  %v1466 = vadd.f32 %v1397, %v1458
  %v1467 = vadd.f32 %v1398, %v1459
  %v1468 = vadd.f32 %v1399, %v1460
  %v1469 = vadd.f32 %v1400, %v1461
  %v1470 = vadd.f32 %v1401, %v1462
  %v1471 = vadd.f32 %v1402, %v1463
  %v1472 = vadd.f32 %v1403, %v1464
  %v1473 = vadd.f32 %v1404, %v1465
  %1474 = vrot.lane.b32.xlu0 %v805, 123
  %v1475 = vpop.permute.xlu0 %1474
  %1476 = vrot.lane.b32.xlu0 %v809, 123
  %v1477 = vpop.permute.xlu0 %1476
  %1478 = vrot.lane.b32.xlu0 %v806, 123
  %v1479 = vpop.permute.xlu0 %1478
  %1480 = vrot.lane.b32.xlu0 %v810, 123
  %v1481 = vpop.permute.xlu0 %1480
  %1482 = vrot.lane.b32.xlu0 %v807, 123
  %v1483 = vpop.permute.xlu0 %1482
  %1484 = vrot.lane.b32.xlu0 %v811, 123
  %v1485 = vpop.permute.xlu0 %1484
  %1486 = vrot.lane.b32.xlu0 %v808, 123
  %v1487 = vpop.permute.xlu0 %1486
  %1488 = vrot.lane.b32.xlu0 %v812, 123
  %v1489 = vpop.permute.xlu0 %1488
  %vm1490 = vcmp.lt.s32.totalorder %v19, 123
  %v1491 = vsel %vm1490, %v1483, %v1487
  %v1492 = vsel %vm1490, %v1485, %v1489
  %v1493 = vsel %vm1490, %v1479, %v1483
  %v1494 = vsel %vm1490, %v1481, %v1485
  %v1495 = vsel %vm1490, %v1475, %v1479
  %v1496 = vsel %vm1490, %v1477, %v1481
  %v1497 = vsel %vm1490, %v1487, %v1475
  %v1498 = vsel %vm1490, %v1489, %v1477
  %vm1499 = vcmp.lt.s32.totalorder %v23, 11
  %vm1500 = vcmp.lt.s32.totalorder %v24, 11
  %vm1501 = vcmp.lt.s32.totalorder %v25, 11
  %vm1502 = vcmp.lt.s32.totalorder %v26, 11
  %v1503 = vsel %vm1499, 1, 0
  %v1504 = vsel %vm1500, 1, 0
  %v1505 = vsel %vm1501, 1, 0
  %v1506 = vsel %vm1502, 1, 0
  %vm1507 = vcmp.eq.s32.totalorder %v1503, 1
  %vm1508 = vcmp.eq.s32.totalorder %v1504, 1
  %vm1509 = vcmp.eq.s32.totalorder %v1505, 1
  %vm1510 = vcmp.eq.s32.totalorder %v1506, 1
  %v1511 = vsel %vm1507, %v1495, 0.0
  %v1512 = vsel %vm1508, %v1493, 0.0
  %v1513 = vsel %vm1509, %v1491, 0.0
  %v1514 = vsel %vm1510, %v1497, 0.0
  %v1515 = vsel %vm1507, %v1496, 0.0
  %v1516 = vsel %vm1508, %v1494, 0.0
  %v1517 = vsel %vm1509, %v1492, 0.0
  %v1518 = vsel %vm1510, %v1498, 0.0
  %1519 = vset.pattern.permute.xlu0 29
  %1520 = vperm.xlu0 %1519, %v11
  %v1521 = vpop.permute.xlu0 %1520
  %1523 = vset.pattern.permute.xlu0 29
  %1524 = vperm.xlu0 %1523, %v12
  %v1525 = vpop.permute.xlu0 %1524
  %v1527 = vmul.f32 %v1521, %v1511
  %v1528 = vmul.f32 %v1521, %v1512
  %v1529 = vmul.f32 %v1521, %v1513
  %v1530 = vmul.f32 %v1521, %v1514
  %v1531 = vmul.f32 %v1525, %v1515
  %v1532 = vmul.f32 %v1525, %v1516
  %v1533 = vmul.f32 %v1525, %v1517
  %v1534 = vmul.f32 %v1525, %v1518
  %v1535 = vadd.f32 %v1466, %v1527
  %v1536 = vadd.f32 %v1467, %v1528
  %v1537 = vadd.f32 %v1468, %v1529
  %v1538 = vadd.f32 %v1469, %v1530
  %v1539 = vadd.f32 %v1470, %v1531
  %v1540 = vadd.f32 %v1471, %v1532
  %v1541 = vadd.f32 %v1472, %v1533
  %v1542 = vadd.f32 %v1473, %v1534
  %v1543 = vmax.f32 %v1535, 0.0
  %v1544 = vmax.f32 %v1536, 0.0
  %v1545 = vmax.f32 %v1537, 0.0
  %v1546 = vmax.f32 %v1538, 0.0
  %v1547 = vmax.f32 %v1539, 0.0
  %v1548 = vmax.f32 %v1540, 0.0
  %v1549 = vmax.f32 %v1541, 0.0
  %v1550 = vmax.f32 %v1542, 0.0
  %1551 = vset.pattern.permute.xlu0 65
  %1552 = vperm.xlu0 %1551, %v11
  %v1553 = vpop.permute.xlu0 %1552
  %1555 = vset.pattern.permute.xlu0 65
  %1556 = vperm.xlu0 %1555, %v12
  %v1557 = vpop.permute.xlu0 %1556
  %1559 = vrot.lane.b32.xlu0 %v11, 98
  %v1560 = vpop.permute.xlu0 %1559
  %1561 = vrot.lane.b32.xlu0 %v12, 98
  %v1562 = vpop.permute.xlu0 %1561
  %vm1563 = vcmask 130048
  %v1564 = vsel %vm1563, %v1560, 0
  %v1566 = vsel %vm1563, %v1562, 0
  %1568 = vmatpush.msra.mxu0 0.0
  %1569 = vmatpush.msra.mxu0 0.0
  %1570 = vmatpush.msra.mxu0 0.0
  %1571 = vmatpush.msra.mxu0 0.0
  %1572 = vmatpush.msra.mxu0 0.0
  %1573 = vmatpush.msra.mxu0 0.0
  %1574 = vmatpush.msra.mxu0 0.0
  %1575 = vmatpush.msra.mxu0 0.0
  %1576 = vmatpush.msra.mxu0 0.0
  %1577 = vmatpush.msra.mxu0 0.0
  %1578 = vmatpush.msra.mxu0 0.0
  %1579 = vmatpush.msra.mxu0 0.0
  %1580 = vmatpush.msra.mxu0 0.0
  %1581 = vmatpush.msra.mxu0 0.0
  %1582 = vmatpush.msra.mxu0 %v1547
  %1583 = vmatpush.msra.mxu0 %v1543
  %1584 = vmatmul.f32.gmra.mxu0 %v1564
  %v1585 = vpop.f32.mrf.mxu0
  %v1586 = vadd.f32 %v1553, %v1585
  %1587 = vmatmul.f32.gmra.mxu0 %v1566
  %v1588 = vpop.f32.mrf.mxu0
  %v1589 = vadd.f32 %v1557, %v1588
  %1590 = vdwg.mxu0
  %1591 = vmatpush.msra.mxu0 0.0
  %1592 = vmatpush.msra.mxu0 0.0
  %1593 = vmatpush.msra.mxu0 0.0
  %1594 = vmatpush.msra.mxu0 0.0
  %1595 = vmatpush.msra.mxu0 0.0
  %1596 = vmatpush.msra.mxu0 0.0
  %1597 = vmatpush.msra.mxu0 0.0
  %1598 = vmatpush.msra.mxu0 0.0
  %1599 = vmatpush.msra.mxu0 0.0
  %1600 = vmatpush.msra.mxu0 0.0
  %1601 = vmatpush.msra.mxu0 0.0
  %1602 = vmatpush.msra.mxu0 0.0
  %1603 = vmatpush.msra.mxu0 0.0
  %1604 = vmatpush.msra.mxu0 0.0
  %1605 = vmatpush.msra.mxu0 %v1548
  %1606 = vmatpush.msra.mxu0 %v1544
  %1607 = vmatmul.f32.gmra.mxu0 %v1564
  %v1608 = vpop.f32.mrf.mxu0
  %v1609 = vadd.f32 %v1553, %v1608
  %1610 = vmatmul.f32.gmra.mxu0 %v1566
  %v1611 = vpop.f32.mrf.mxu0
  %v1612 = vadd.f32 %v1557, %v1611
  %1613 = vdwg.mxu0
  %1614 = vmatpush.msra.mxu0 0.0
  %1615 = vmatpush.msra.mxu0 0.0
  %1616 = vmatpush.msra.mxu0 0.0
  %1617 = vmatpush.msra.mxu0 0.0
  %1618 = vmatpush.msra.mxu0 0.0
  %1619 = vmatpush.msra.mxu0 0.0
  %1620 = vmatpush.msra.mxu0 0.0
  %1621 = vmatpush.msra.mxu0 0.0
  %1622 = vmatpush.msra.mxu0 0.0
  %1623 = vmatpush.msra.mxu0 0.0
  %1624 = vmatpush.msra.mxu0 0.0
  %1625 = vmatpush.msra.mxu0 0.0
  %1626 = vmatpush.msra.mxu0 0.0
  %1627 = vmatpush.msra.mxu0 0.0
  %1628 = vmatpush.msra.mxu0 %v1549
  %1629 = vmatpush.msra.mxu0 %v1545
  %1630 = vmatmul.f32.gmra.mxu0 %v1564
  %v1631 = vpop.f32.mrf.mxu0
  %v1632 = vadd.f32 %v1553, %v1631
  %1633 = vmatmul.f32.gmra.mxu0 %v1566
  %v1634 = vpop.f32.mrf.mxu0
  %v1635 = vadd.f32 %v1557, %v1634
  %1636 = vdwg.mxu0
  %1637 = vmatpush.msra.mxu0 0.0
  %1638 = vmatpush.msra.mxu0 0.0
  %1639 = vmatpush.msra.mxu0 0.0
  %1640 = vmatpush.msra.mxu0 0.0
  %1641 = vmatpush.msra.mxu0 0.0
  %1642 = vmatpush.msra.mxu0 0.0
  %1643 = vmatpush.msra.mxu0 0.0
  %1644 = vmatpush.msra.mxu0 0.0
  %1645 = vmatpush.msra.mxu0 0.0
  %1646 = vmatpush.msra.mxu0 0.0
  %1647 = vmatpush.msra.mxu0 0.0
  %1648 = vmatpush.msra.mxu0 0.0
  %1649 = vmatpush.msra.mxu0 0.0
  %1650 = vmatpush.msra.mxu0 0.0
  %1651 = vmatpush.msra.mxu0 %v1550
  %1652 = vmatpush.msra.mxu0 %v1546
  %1653 = vmatmul.f32.gmra.mxu0 %v1564
  %v1654 = vpop.f32.mrf.mxu0
  %v1655 = vadd.f32 %v1553, %v1654
  %1656 = vmatmul.f32.gmra.mxu0 %v1566
  %v1657 = vpop.f32.mrf.mxu0
  %v1658 = vadd.f32 %v1557, %v1657
  %1659 = vdwg.mxu0
  %v1660 = vmax.f32 %v1586, 0.0
  %v1661 = vmax.f32 %v1609, 0.0
  %v1662 = vmax.f32 %v1632, 0.0
  %v1663 = vmax.f32 %v1655, 0.0
  %v1664 = vmax.f32 %v1589, 0.0
  %v1665 = vmax.f32 %v1612, 0.0
  %v1666 = vmax.f32 %v1635, 0.0
  %v1667 = vmax.f32 %v1658, 0.0
  %1668 = vset.pattern.permute.xlu0 66
  %1669 = vperm.xlu0 %1668, %v11
  %v1670 = vpop.permute.xlu0 %1669
  %1672 = vset.pattern.permute.xlu0 66
  %1673 = vperm.xlu0 %1672, %v12
  %v1674 = vpop.permute.xlu0 %1673
  %1676 = vrot.lane.b32.xlu0 %v11, 82
  %v1677 = vpop.permute.xlu0 %1676
  %1678 = vrot.lane.b32.xlu0 %v12, 82
  %v1679 = vpop.permute.xlu0 %1678
  %v1680 = vsel %vm1563, %v1677, 0
  %v1682 = vsel %vm1563, %v1679, 0
  %1684 = vmatpush.msra.mxu0 0.0
  %1685 = vmatpush.msra.mxu0 0.0
  %1686 = vmatpush.msra.mxu0 0.0
  %1687 = vmatpush.msra.mxu0 0.0
  %1688 = vmatpush.msra.mxu0 0.0
  %1689 = vmatpush.msra.mxu0 0.0
  %1690 = vmatpush.msra.mxu0 0.0
  %1691 = vmatpush.msra.mxu0 0.0
  %1692 = vmatpush.msra.mxu0 0.0
  %1693 = vmatpush.msra.mxu0 0.0
  %1694 = vmatpush.msra.mxu0 0.0
  %1695 = vmatpush.msra.mxu0 0.0
  %1696 = vmatpush.msra.mxu0 0.0
  %1697 = vmatpush.msra.mxu0 0.0
  %1698 = vmatpush.msra.mxu0 %v1664
  %1699 = vmatpush.msra.mxu0 %v1660
  %1700 = vmatmul.f32.gmra.mxu0 %v1680
  %v1701 = vpop.f32.mrf.mxu0
  %v1702 = vadd.f32 %v1670, %v1701
  %1703 = vmatmul.f32.gmra.mxu0 %v1682
  %v1704 = vpop.f32.mrf.mxu0
  %v1705 = vadd.f32 %v1674, %v1704
  %1706 = vdwg.mxu0
  %1707 = vmatpush.msra.mxu0 0.0
  %1708 = vmatpush.msra.mxu0 0.0
  %1709 = vmatpush.msra.mxu0 0.0
  %1710 = vmatpush.msra.mxu0 0.0
  %1711 = vmatpush.msra.mxu0 0.0
  %1712 = vmatpush.msra.mxu0 0.0
  %1713 = vmatpush.msra.mxu0 0.0
  %1714 = vmatpush.msra.mxu0 0.0
  %1715 = vmatpush.msra.mxu0 0.0
  %1716 = vmatpush.msra.mxu0 0.0
  %1717 = vmatpush.msra.mxu0 0.0
  %1718 = vmatpush.msra.mxu0 0.0
  %1719 = vmatpush.msra.mxu0 0.0
  %1720 = vmatpush.msra.mxu0 0.0
  %1721 = vmatpush.msra.mxu0 %v1665
  %1722 = vmatpush.msra.mxu0 %v1661
  %1723 = vmatmul.f32.gmra.mxu0 %v1680
  %v1724 = vpop.f32.mrf.mxu0
  %v1725 = vadd.f32 %v1670, %v1724
  %1726 = vmatmul.f32.gmra.mxu0 %v1682
  %v1727 = vpop.f32.mrf.mxu0
  %v1728 = vadd.f32 %v1674, %v1727
  %1729 = vdwg.mxu0
  %1730 = vmatpush.msra.mxu0 0.0
  %1731 = vmatpush.msra.mxu0 0.0
  %1732 = vmatpush.msra.mxu0 0.0
  %1733 = vmatpush.msra.mxu0 0.0
  %1734 = vmatpush.msra.mxu0 0.0
  %1735 = vmatpush.msra.mxu0 0.0
  %1736 = vmatpush.msra.mxu0 0.0
  %1737 = vmatpush.msra.mxu0 0.0
  %1738 = vmatpush.msra.mxu0 0.0
  %1739 = vmatpush.msra.mxu0 0.0
  %1740 = vmatpush.msra.mxu0 0.0
  %1741 = vmatpush.msra.mxu0 0.0
  %1742 = vmatpush.msra.mxu0 0.0
  %1743 = vmatpush.msra.mxu0 0.0
  %1744 = vmatpush.msra.mxu0 %v1666
  %1745 = vmatpush.msra.mxu0 %v1662
  %1746 = vmatmul.f32.gmra.mxu0 %v1680
  %v1747 = vpop.f32.mrf.mxu0
  %v1748 = vadd.f32 %v1670, %v1747
  %1749 = vmatmul.f32.gmra.mxu0 %v1682
  %v1750 = vpop.f32.mrf.mxu0
  %v1751 = vadd.f32 %v1674, %v1750
  %1752 = vdwg.mxu0
  %1753 = vmatpush.msra.mxu0 0.0
  %1754 = vmatpush.msra.mxu0 0.0
  %1755 = vmatpush.msra.mxu0 0.0
  %1756 = vmatpush.msra.mxu0 0.0
  %1757 = vmatpush.msra.mxu0 0.0
  %1758 = vmatpush.msra.mxu0 0.0
  %1759 = vmatpush.msra.mxu0 0.0
  %1760 = vmatpush.msra.mxu0 0.0
  %1761 = vmatpush.msra.mxu0 0.0
  %1762 = vmatpush.msra.mxu0 0.0
  %1763 = vmatpush.msra.mxu0 0.0
  %1764 = vmatpush.msra.mxu0 0.0
  %1765 = vmatpush.msra.mxu0 0.0
  %1766 = vmatpush.msra.mxu0 0.0
  %1767 = vmatpush.msra.mxu0 %v1667
  %1768 = vmatpush.msra.mxu0 %v1663
  %1769 = vmatmul.f32.gmra.mxu0 %v1680
  %v1770 = vpop.f32.mrf.mxu0
  %v1771 = vadd.f32 %v1670, %v1770
  %1772 = vmatmul.f32.gmra.mxu0 %v1682
  %v1773 = vpop.f32.mrf.mxu0
  %v1774 = vadd.f32 %v1674, %v1773
  %1775 = vdwg.mxu0
  %1776 = vst [vmem:[%s2] sm:$0xff] %v1702
  %1777 = vst [vmem:[%s2 + $0x8] sm:$0xff] %v1725
  %1778 = vst [vmem:[%s2 + $0x10] sm:$0xff] %v1705
  %1779 = vst [vmem:[%s2 + $0x18] sm:$0xff] %v1728
  %s1780 = scalar_lea.vmem %s2, 32
  %1781 = vst [vmem:[%s1780] sm:$0xff] %v1748
  %1782 = vst [vmem:[%s1780 + $0x8] sm:$0xff] %v1771
  %1783 = vst [vmem:[%s1780 + $0x10] sm:$0xff] %v1751
  %1784 = vst [vmem:[%s1780 + $0x18] sm:$0xff] %v1774
  // Predicated region
  $region10: #{ms_threeway_dw_bottleneck.1} parent=0 // pred_check
    _
  $region11: #{ms_threeway_dw_bottleneck.1} parent=0 // pred_check_branch
    %1786 = sbr.rel (0) target = $region13
  $region12: #{ms_threeway_dw_bottleneck.1} parent=0 // pred_region
    _
  $region13: #{ms_threeway_dw_bottleneck.1} parent=0 // pred_fallthru
    _
  // Predicated region
  $region14: #{ms_threeway_dw_bottleneck.1} parent=0 // pred_check
    _
  $region15: #{ms_threeway_dw_bottleneck.1} parent=0 // pred_check_branch
    %1788 = sbr.rel (0) target = $region17
  $region16: #{ms_threeway_dw_bottleneck.1} parent=0 // pred_region
    _
  $region17: #{ms_threeway_dw_bottleneck.1} parent=0 // pred_fallthru
    _

</llo_original>
